<compile_context>
chip_gen: v7x
topology: tpu7x:2x2x1
jax: 0.10.0
libtpu: 0.0.40
codegen_flags: <defaults>
</compile_context>

<pallas_src>
import jax
import jax.numpy as jnp
from jax.experimental import pallas as pl
from jax.experimental.pallas import tpu as pltpu


def attn_decoder_kernel(idx_ref, enc_ref, h_ref, c_ref, mat_ref, vec_ref, embed_hbm,
                        out_ref, hout_ref, cout_ref,
                        emb_buf, emb_sem):
    B, S, _ = enc_ref.shape
    H = h_ref.shape[1]
    V = out_ref.shape[1]

    # ---- embedding row gather: issue B tiny HBM->VMEM DMAs up front so they ----
    # ---- overlap with the attention math below. idx lives in SMEM.          ----
    copies = [
        pltpu.make_async_copy(
            embed_hbm.at[pl.ds(idx_ref[b], 1), :],
            emb_buf.at[pl.ds(b, 1), :],
            emb_sem.at[b])
        for b in range(B)
    ]
    for cp in copies:
        cp.start()

    enc = enc_ref[...]                      # (B, S, 2H)
    h = h_ref[...]                          # (B, H)
    c = c_ref[...]                          # (B, H)

    # ---- static slices out of the packed vector slab (single DMA'd input) ----
    we_h   = vec_ref[0:1, 0:H]              # (1, H)   energy weight on hidden
    we_enc = vec_ref[1:2, 0:2 * H]          # (1, 2H)  energy weight on encoder states
    b_lstm = vec_ref[2:3, 0:4 * H]          # (1, 4H)  b_ih + b_hh
    bfc    = vec_ref[3:4, 0:V]              # (1, V)   fc bias
    be     = vec_ref[4:5, 0:1]              # (1, 1)   energy bias

    # ---- attention energy: VPU multiply + lane reduce (no N=1 MXU matmul) ----
    e_h = jnp.sum(h * we_h, axis=1, keepdims=True)            # (B, 1)
    e_enc = jnp.sum(enc * we_enc[None, :, :], axis=2)          # (B, S)
    energy = e_h + e_enc + be                                  # (B, S)

    # softmax over the sequence axis (dim=1 in PyTorch)
    m = jnp.max(energy, axis=1, keepdims=True)
    p = jnp.exp(energy - m)
    att = p * pl.reciprocal(jnp.sum(p, axis=1, keepdims=True), approx=False)

    # context = bmm(att (B,1,S), enc (B,S,2H)) -> (B, 2H)
    # (S=16 here; for large S restructure to a dot_general batched over B.)
    context = jnp.sum(att[:, :, None] * enc, axis=1)

    # ---- wait for the gathered embedding rows ----
    for cp in copies:
        cp.wait()
    emb = emb_buf[...]                                         # (B, E)

    # ---- fused single-step LSTM: one (B, 2H+E+H) x (2H+E+H, 4H) matmul ----
    inp = jnp.concatenate([context, emb, h], axis=1)           # (B, D) = (8, 128)
    w_packed = mat_ref[:, 0:4 * H]                             # (D, 4H)
    gates = jnp.dot(inp, w_packed,
                    preferred_element_type=jnp.float32) + b_lstm   # (B, 4H)

    # gate activations on the full (B, 4H) vreg, then slice (gate order i,f,g,o)
    sig_all = jax.nn.sigmoid(gates)
    tanh_all = jnp.tanh(gates)
    i_g = sig_all[:, 0:H]
    f_g = sig_all[:, H:2 * H]
    g_g = tanh_all[:, 2 * H:3 * H]
    o_g = sig_all[:, 3 * H:4 * H]
    c_new = f_g * c + i_g * g_g
    h_new = o_g * jnp.tanh(c_new)

    # ---- output projection (fc) from the same matrix slab ----
    wfc = mat_ref[0:H, 4 * H:4 * H + V]                        # (H, V)
    logits = jnp.dot(h_new, wfc, preferred_element_type=jnp.float32) + bfc

    out_ref[...] = logits.astype(out_ref.dtype)
    hout_ref[...] = h_new.astype(hout_ref.dtype)
    cout_ref[...] = c_new.astype(cout_ref.dtype)


def prepare_params(p):
    """One-time weight packing (run OUTSIDE the decode loop)."""
    H = p["w_hh"].shape[1]
    E = p["embed"].shape[1]
    V = p["fc_w"].shape[0]
    D = 2 * H + E + H                     # packed LSTM input width
    L = max(4 * H, 2 * H, V, 128)         # lane width of the vector slab

    # Fused LSTM input weight, row order [context(2H) | embedding(E) | hidden(H)].
    w_packed = jnp.concatenate(
        [p["w_ih"].T.astype(jnp.float32),       # (2H+E, 4H)
         p["w_hh"].T.astype(jnp.float32)],      # (H,    4H)
        axis=0)                                  # (D, 4H)

    # fc weight (H, V), padded on rows so it shares the matrix slab.
    wfc_pad = jnp.zeros((D, V), jnp.float32).at[:H, :].set(p["fc_w"].T)
    mat_slab = jnp.concatenate([w_packed, wfc_pad], axis=1)     # (D, 4H+V)

    # Small vectors / biases packed into a single (8, L) slab.
    vec_slab = jnp.zeros((8, L), jnp.float32)
    vec_slab = vec_slab.at[0, :H].set(p["energy_w"][0, :H])          # we_h
    vec_slab = vec_slab.at[1, :2 * H].set(p["energy_w"][0, H:])      # we_enc
    vec_slab = vec_slab.at[2, :4 * H].set(p["b_ih"] + p["b_hh"])     # lstm bias fold
    vec_slab = vec_slab.at[3, :V].set(p["fc_b"])                     # fc bias
    vec_slab = vec_slab.at[4, 0].set(p["energy_b"][0])               # energy bias

    # On v5e/v6e, casting mat_slab / embed to bfloat16 here (keeping f32
    # accumulation in the kernel) roughly halves DMA bytes and matches the MXU
    # native dtype; kept f32 here to preserve the 1e-4 reference check.
    return {
        "mat_slab": mat_slab,
        "vec_slab": vec_slab,
        "embed": p["embed"].astype(jnp.float32),
    }


@jax.jit
def attn_decoder_forward(x, hidden_state, cell_state, encoder_states, prep):
    B, S, twoH = encoder_states.shape
    H = twoH // 2
    V, E = prep["embed"].shape

    h0 = hidden_state[0]                         # (B, H)
    c0 = cell_state[0]                           # (B, H)
    idx = x.reshape(-1).astype(jnp.int32)        # (B,)

    vspec = pl.BlockSpec(memory_space=pltpu.MemorySpace.VMEM)
    out, h_new, c_new = pl.pallas_call(
        attn_decoder_kernel,
        out_shape=(
            jax.ShapeDtypeStruct((B, V), jnp.float32),
            jax.ShapeDtypeStruct((B, H), jnp.float32),
            jax.ShapeDtypeStruct((B, H), jnp.float32),
        ),
        in_specs=[
            pl.BlockSpec(memory_space=pltpu.MemorySpace.SMEM),   # token ids
            vspec,                                               # encoder_states
            vspec,                                               # h0
            vspec,                                               # c0
            vspec,                                               # mat_slab
            vspec,                                               # vec_slab
            pl.BlockSpec(memory_space=pl.ANY),                   # embed table (HBM)
        ],
        out_specs=(vspec, vspec, vspec),
        scratch_shapes=[
            pltpu.VMEM((B, E), jnp.float32),                     # gathered embeddings
            pltpu.SemaphoreType.DMA((B,)),
        ],
        # TODO(synk): for a real vocabulary, add a grid over V-tiles of the fc
        # projection with dimension_semantics=("parallel",) so v7x's second
        # TensorCore is used and per-tile buffers fit its 64 MiB VMEM.
    )(idx, encoder_states, h0, c0, prep["mat_slab"], prep["vec_slab"], prep["embed"])

    return out, h_new[None], c_new[None]


def reference_forward(x, hidden_state, cell_state, encoder_states, p):
    # Pure-JAX reference mirroring the PyTorch forward exactly.
    B, S, _ = encoder_states.shape
    H = hidden_state.shape[2]
    h = hidden_state[0]
    c = cell_state[0]
    h_rep = jnp.broadcast_to(h[:, None, :], (B, S, H))
    cat = jnp.concatenate([h_rep, encoder_states], axis=2)              # (B, S, 3H)
    energy = cat @ p["energy_w"].T + p["energy_b"]                      # (B, S, 1)
    att = jax.nn.softmax(energy, axis=1)[..., 0]                        # (B, S)
    context = jnp.einsum("bs,bsk->bk", att, encoder_states)             # (B, 2H)
    emb = p["embed"][x.reshape(-1)]                                     # (B, E)
    inp = jnp.concatenate([context, emb], axis=1)                       # (B, 2H+E)
    gates = inp @ p["w_ih"].T + p["b_ih"] + h @ p["w_hh"].T + p["b_hh"]
    i_g = jax.nn.sigmoid(gates[:, :H])
    f_g = jax.nn.sigmoid(gates[:, H:2 * H])
    g_g = jnp.tanh(gates[:, 2 * H:3 * H])
    o_g = jax.nn.sigmoid(gates[:, 3 * H:])
    c_new = f_g * c + i_g * g_g
    h_new = o_g * jnp.tanh(c_new)
    logits = h_new @ p["fc_w"].T + p["fc_b"]
    return logits, h_new[None], c_new[None]


if __name__ == "__main__":
    # Small, forward-consistent shapes.
    V = 64          # input_size (vocab)
    E = 32          # embedding_size
    H = 32          # hidden_size
    B = 8           # batch
    S = 16          # encoder sequence length

    key = jax.random.PRNGKey(0)
    ks = jax.random.split(key, 12)
    scale = 0.1
    params = {
        "embed":    scale * jax.random.normal(ks[0], (V, E), jnp.float32),
        "w_ih":     scale * jax.random.normal(ks[1], (4 * H, 2 * H + E), jnp.float32),
        "w_hh":     scale * jax.random.normal(ks[2], (4 * H, H), jnp.float32),
        "b_ih":     scale * jax.random.normal(ks[3], (4 * H,), jnp.float32),
        "b_hh":     scale * jax.random.normal(ks[4], (4 * H,), jnp.float32),
        "fc_w":     scale * jax.random.normal(ks[5], (V, H), jnp.float32),
        "fc_b":     scale * jax.random.normal(ks[6], (V,), jnp.float32),
        "energy_w": scale * jax.random.normal(ks[7], (1, 3 * H), jnp.float32),
        "energy_b": scale * jax.random.normal(ks[8], (1,), jnp.float32),
    }

    x = jax.random.randint(ks[9], (B,), 0, V, jnp.int32)
    hidden_state = scale * jax.random.normal(ks[10], (1, B, H), jnp.float32)
    cell_state = scale * jax.random.normal(ks[11], (1, B, H), jnp.float32)
    encoder_states = scale * jax.random.normal(jax.random.PRNGKey(1), (B, S, 2 * H), jnp.float32)

    # One-time packing (hoisted out of the per-token decode path).
    prep = prepare_params(params)

    out, h_new, c_new = attn_decoder_forward(x, hidden_state, cell_state,
                                             encoder_states, prep)
    jax.block_until_ready((out, h_new, c_new))

    ref_out, ref_h, ref_c = reference_forward(x, hidden_state, cell_state,
                                              encoder_states, params)
    assert out.shape == (B, V) and h_new.shape == (1, B, H) and c_new.shape == (1, B, H)
    assert jnp.allclose(out, ref_out, atol=1e-4, rtol=1e-4)
    assert jnp.allclose(h_new, ref_h, atol=1e-4, rtol=1e-4)
    assert jnp.allclose(c_new, ref_c, atol=1e-4, rtol=1e-4)

    print("KERNEL_OK")
</pallas_src>

<mosaic_0001>
module attributes {stable_mosaic.version = 11 : i64} {
  func.func @attn_decoder_kernel(%arg0: memref<8xi32, #tpu.memory_space<smem>>, %arg1: memref<8x16x64xf32, #tpu.memory_space<vmem>>, %arg2: memref<8x32xf32, #tpu.memory_space<vmem>>, %arg3: memref<8x32xf32, #tpu.memory_space<vmem>>, %arg4: memref<128x192xf32, #tpu.memory_space<vmem>>, %arg5: memref<8x128xf32, #tpu.memory_space<vmem>>, %arg6: memref<64x32xf32, #tpu.memory_space<any>>, %arg7: memref<8x64xf32, #tpu.memory_space<vmem>>, %arg8: memref<8x32xf32, #tpu.memory_space<vmem>>, %arg9: memref<8x32xf32, #tpu.memory_space<vmem>>, %arg10: memref<8x32xf32, #tpu.memory_space<vmem>>, %arg11: memref<8x!tpu.dma_semaphore, #tpu.memory_space<semaphore_mem>>) attributes {dimension_semantics = [], scalar_prefetch = 0 : i64, scratch_operands = 2 : i64, tpu.core_type = #tpu.core_type<tc>} {
    %c0 = arith.constant 0 : index
    %0 = memref.load %arg0[%c0] : memref<8xi32, #tpu.memory_space<smem>>
    %c1 = arith.constant 1 : index
    %1 = memref.load %arg0[%c1] : memref<8xi32, #tpu.memory_space<smem>>
    %c2 = arith.constant 2 : index
    %2 = memref.load %arg0[%c2] : memref<8xi32, #tpu.memory_space<smem>>
    %c3 = arith.constant 3 : index
    %3 = memref.load %arg0[%c3] : memref<8xi32, #tpu.memory_space<smem>>
    %c4 = arith.constant 4 : index
    %4 = memref.load %arg0[%c4] : memref<8xi32, #tpu.memory_space<smem>>
    %c5 = arith.constant 5 : index
    %5 = memref.load %arg0[%c5] : memref<8xi32, #tpu.memory_space<smem>>
    %c6 = arith.constant 6 : index
    %6 = memref.load %arg0[%c6] : memref<8xi32, #tpu.memory_space<smem>>
    %c7 = arith.constant 7 : index
    %7 = memref.load %arg0[%c7] : memref<8xi32, #tpu.memory_space<smem>>
    %c0_i32 = arith.constant 0 : i32
    %c0_i32_0 = arith.constant 0 : i32
    %8 = tpu.memref_slice %arg6[%0, %c0_i32_0] : memref<64x32xf32, #tpu.memory_space<any>> -> memref<1x32xf32, #tpu.memory_space<any>>
    %c0_i32_1 = arith.constant 0 : i32
    %c0_i32_2 = arith.constant 0 : i32
    %9 = tpu.memref_slice %arg10[%c0_i32_1, %c0_i32_2] : memref<8x32xf32, #tpu.memory_space<vmem>> -> memref<1x32xf32, #tpu.memory_space<vmem>>
    %10 = tpu.memref_slice %arg11[%c0_i32] : memref<8x!tpu.dma_semaphore, #tpu.memory_space<semaphore_mem>> -> memref<1x!tpu.dma_semaphore, #tpu.memory_space<semaphore_mem>>
    %11 = tpu.memref_squeeze %10 : memref<1x!tpu.dma_semaphore, #tpu.memory_space<semaphore_mem>> -> memref<!tpu.dma_semaphore, #tpu.memory_space<semaphore_mem>>
    tpu.enqueue_dma source(%8 : memref<1x32xf32, #tpu.memory_space<any>>) target(%9 : memref<1x32xf32, #tpu.memory_space<vmem>>) target_semaphore(%11 : memref<!tpu.dma_semaphore, #tpu.memory_space<semaphore_mem>>)
    %c1_i32 = arith.constant 1 : i32
    %c0_i32_3 = arith.constant 0 : i32
    %12 = tpu.memref_slice %arg6[%1, %c0_i32_3] : memref<64x32xf32, #tpu.memory_space<any>> -> memref<1x32xf32, #tpu.memory_space<any>>
    %c1_i32_4 = arith.constant 1 : i32
    %c0_i32_5 = arith.constant 0 : i32
    %13 = tpu.memref_slice %arg10[%c1_i32_4, %c0_i32_5] : memref<8x32xf32, #tpu.memory_space<vmem>> -> memref<1x32xf32, #tpu.memory_space<vmem>>
    %14 = tpu.memref_slice %arg11[%c1_i32] : memref<8x!tpu.dma_semaphore, #tpu.memory_space<semaphore_mem>> -> memref<1x!tpu.dma_semaphore, #tpu.memory_space<semaphore_mem>>
    %15 = tpu.memref_squeeze %14 : memref<1x!tpu.dma_semaphore, #tpu.memory_space<semaphore_mem>> -> memref<!tpu.dma_semaphore, #tpu.memory_space<semaphore_mem>>
    tpu.enqueue_dma source(%12 : memref<1x32xf32, #tpu.memory_space<any>>) target(%13 : memref<1x32xf32, #tpu.memory_space<vmem>>) target_semaphore(%15 : memref<!tpu.dma_semaphore, #tpu.memory_space<semaphore_mem>>)
    %c2_i32 = arith.constant 2 : i32
    %c0_i32_6 = arith.constant 0 : i32
    %16 = tpu.memref_slice %arg6[%2, %c0_i32_6] : memref<64x32xf32, #tpu.memory_space<any>> -> memref<1x32xf32, #tpu.memory_space<any>>
    %c2_i32_7 = arith.constant 2 : i32
    %c0_i32_8 = arith.constant 0 : i32
    %17 = tpu.memref_slice %arg10[%c2_i32_7, %c0_i32_8] : memref<8x32xf32, #tpu.memory_space<vmem>> -> memref<1x32xf32, #tpu.memory_space<vmem>>
    %18 = tpu.memref_slice %arg11[%c2_i32] : memref<8x!tpu.dma_semaphore, #tpu.memory_space<semaphore_mem>> -> memref<1x!tpu.dma_semaphore, #tpu.memory_space<semaphore_mem>>
    %19 = tpu.memref_squeeze %18 : memref<1x!tpu.dma_semaphore, #tpu.memory_space<semaphore_mem>> -> memref<!tpu.dma_semaphore, #tpu.memory_space<semaphore_mem>>
    tpu.enqueue_dma source(%16 : memref<1x32xf32, #tpu.memory_space<any>>) target(%17 : memref<1x32xf32, #tpu.memory_space<vmem>>) target_semaphore(%19 : memref<!tpu.dma_semaphore, #tpu.memory_space<semaphore_mem>>)
    %c3_i32 = arith.constant 3 : i32
    %c0_i32_9 = arith.constant 0 : i32
    %20 = tpu.memref_slice %arg6[%3, %c0_i32_9] : memref<64x32xf32, #tpu.memory_space<any>> -> memref<1x32xf32, #tpu.memory_space<any>>
    %c3_i32_10 = arith.constant 3 : i32
    %c0_i32_11 = arith.constant 0 : i32
    %21 = tpu.memref_slice %arg10[%c3_i32_10, %c0_i32_11] : memref<8x32xf32, #tpu.memory_space<vmem>> -> memref<1x32xf32, #tpu.memory_space<vmem>>
    %22 = tpu.memref_slice %arg11[%c3_i32] : memref<8x!tpu.dma_semaphore, #tpu.memory_space<semaphore_mem>> -> memref<1x!tpu.dma_semaphore, #tpu.memory_space<semaphore_mem>>
    %23 = tpu.memref_squeeze %22 : memref<1x!tpu.dma_semaphore, #tpu.memory_space<semaphore_mem>> -> memref<!tpu.dma_semaphore, #tpu.memory_space<semaphore_mem>>
    tpu.enqueue_dma source(%20 : memref<1x32xf32, #tpu.memory_space<any>>) target(%21 : memref<1x32xf32, #tpu.memory_space<vmem>>) target_semaphore(%23 : memref<!tpu.dma_semaphore, #tpu.memory_space<semaphore_mem>>)
    %c4_i32 = arith.constant 4 : i32
    %c0_i32_12 = arith.constant 0 : i32
    %24 = tpu.memref_slice %arg6[%4, %c0_i32_12] : memref<64x32xf32, #tpu.memory_space<any>> -> memref<1x32xf32, #tpu.memory_space<any>>
    %c4_i32_13 = arith.constant 4 : i32
    %c0_i32_14 = arith.constant 0 : i32
    %25 = tpu.memref_slice %arg10[%c4_i32_13, %c0_i32_14] : memref<8x32xf32, #tpu.memory_space<vmem>> -> memref<1x32xf32, #tpu.memory_space<vmem>>
    %26 = tpu.memref_slice %arg11[%c4_i32] : memref<8x!tpu.dma_semaphore, #tpu.memory_space<semaphore_mem>> -> memref<1x!tpu.dma_semaphore, #tpu.memory_space<semaphore_mem>>
    %27 = tpu.memref_squeeze %26 : memref<1x!tpu.dma_semaphore, #tpu.memory_space<semaphore_mem>> -> memref<!tpu.dma_semaphore, #tpu.memory_space<semaphore_mem>>
    tpu.enqueue_dma source(%24 : memref<1x32xf32, #tpu.memory_space<any>>) target(%25 : memref<1x32xf32, #tpu.memory_space<vmem>>) target_semaphore(%27 : memref<!tpu.dma_semaphore, #tpu.memory_space<semaphore_mem>>)
    %c5_i32 = arith.constant 5 : i32
    %c0_i32_15 = arith.constant 0 : i32
    %28 = tpu.memref_slice %arg6[%5, %c0_i32_15] : memref<64x32xf32, #tpu.memory_space<any>> -> memref<1x32xf32, #tpu.memory_space<any>>
    %c5_i32_16 = arith.constant 5 : i32
    %c0_i32_17 = arith.constant 0 : i32
    %29 = tpu.memref_slice %arg10[%c5_i32_16, %c0_i32_17] : memref<8x32xf32, #tpu.memory_space<vmem>> -> memref<1x32xf32, #tpu.memory_space<vmem>>
    %30 = tpu.memref_slice %arg11[%c5_i32] : memref<8x!tpu.dma_semaphore, #tpu.memory_space<semaphore_mem>> -> memref<1x!tpu.dma_semaphore, #tpu.memory_space<semaphore_mem>>
    %31 = tpu.memref_squeeze %30 : memref<1x!tpu.dma_semaphore, #tpu.memory_space<semaphore_mem>> -> memref<!tpu.dma_semaphore, #tpu.memory_space<semaphore_mem>>
    tpu.enqueue_dma source(%28 : memref<1x32xf32, #tpu.memory_space<any>>) target(%29 : memref<1x32xf32, #tpu.memory_space<vmem>>) target_semaphore(%31 : memref<!tpu.dma_semaphore, #tpu.memory_space<semaphore_mem>>)
    %c6_i32 = arith.constant 6 : i32
    %c0_i32_18 = arith.constant 0 : i32
    %32 = tpu.memref_slice %arg6[%6, %c0_i32_18] : memref<64x32xf32, #tpu.memory_space<any>> -> memref<1x32xf32, #tpu.memory_space<any>>
    %c6_i32_19 = arith.constant 6 : i32
    %c0_i32_20 = arith.constant 0 : i32
    %33 = tpu.memref_slice %arg10[%c6_i32_19, %c0_i32_20] : memref<8x32xf32, #tpu.memory_space<vmem>> -> memref<1x32xf32, #tpu.memory_space<vmem>>
    %34 = tpu.memref_slice %arg11[%c6_i32] : memref<8x!tpu.dma_semaphore, #tpu.memory_space<semaphore_mem>> -> memref<1x!tpu.dma_semaphore, #tpu.memory_space<semaphore_mem>>
    %35 = tpu.memref_squeeze %34 : memref<1x!tpu.dma_semaphore, #tpu.memory_space<semaphore_mem>> -> memref<!tpu.dma_semaphore, #tpu.memory_space<semaphore_mem>>
    tpu.enqueue_dma source(%32 : memref<1x32xf32, #tpu.memory_space<any>>) target(%33 : memref<1x32xf32, #tpu.memory_space<vmem>>) target_semaphore(%35 : memref<!tpu.dma_semaphore, #tpu.memory_space<semaphore_mem>>)
    %c7_i32 = arith.constant 7 : i32
    %c0_i32_21 = arith.constant 0 : i32
    %36 = tpu.memref_slice %arg6[%7, %c0_i32_21] : memref<64x32xf32, #tpu.memory_space<any>> -> memref<1x32xf32, #tpu.memory_space<any>>
    %c7_i32_22 = arith.constant 7 : i32
    %c0_i32_23 = arith.constant 0 : i32
    %37 = tpu.memref_slice %arg10[%c7_i32_22, %c0_i32_23] : memref<8x32xf32, #tpu.memory_space<vmem>> -> memref<1x32xf32, #tpu.memory_space<vmem>>
    %38 = tpu.memref_slice %arg11[%c7_i32] : memref<8x!tpu.dma_semaphore, #tpu.memory_space<semaphore_mem>> -> memref<1x!tpu.dma_semaphore, #tpu.memory_space<semaphore_mem>>
    %39 = tpu.memref_squeeze %38 : memref<1x!tpu.dma_semaphore, #tpu.memory_space<semaphore_mem>> -> memref<!tpu.dma_semaphore, #tpu.memory_space<semaphore_mem>>
    tpu.enqueue_dma source(%36 : memref<1x32xf32, #tpu.memory_space<any>>) target(%37 : memref<1x32xf32, #tpu.memory_space<vmem>>) target_semaphore(%39 : memref<!tpu.dma_semaphore, #tpu.memory_space<semaphore_mem>>)
    %c0_24 = arith.constant 0 : index
    %c0_25 = arith.constant 0 : index
    %c0_26 = arith.constant 0 : index
    %40 = vector.load %arg1[%c0_24, %c0_25, %c0_26] : memref<8x16x64xf32, #tpu.memory_space<vmem>>, vector<8x16x64xf32>
    %c0_27 = arith.constant 0 : index
    %c0_28 = arith.constant 0 : index
    %41 = vector.load %arg2[%c0_27, %c0_28] : memref<8x32xf32, #tpu.memory_space<vmem>>, vector<8x32xf32>
    %c0_29 = arith.constant 0 : index
    %c0_30 = arith.constant 0 : index
    %42 = vector.load %arg3[%c0_29, %c0_30] : memref<8x32xf32, #tpu.memory_space<vmem>>, vector<8x32xf32>
    %c0_31 = arith.constant 0 : index
    %c0_32 = arith.constant 0 : index
    %43 = vector.load %arg5[%c0_31, %c0_32] : memref<8x128xf32, #tpu.memory_space<vmem>>, vector<1x32xf32>
    %c1_33 = arith.constant 1 : index
    %c0_34 = arith.constant 0 : index
    %44 = vector.load %arg5[%c1_33, %c0_34] : memref<8x128xf32, #tpu.memory_space<vmem>>, vector<1x64xf32>
    %c2_35 = arith.constant 2 : index
    %c0_36 = arith.constant 0 : index
    %45 = vector.load %arg5[%c2_35, %c0_36] : memref<8x128xf32, #tpu.memory_space<vmem>>, vector<1x128xf32>
    %c3_37 = arith.constant 3 : index
    %c0_38 = arith.constant 0 : index
    %46 = vector.load %arg5[%c3_37, %c0_38] : memref<8x128xf32, #tpu.memory_space<vmem>>, vector<1x64xf32>
    %c4_39 = arith.constant 4 : index
    %c0_40 = arith.constant 0 : index
    %47 = vector.load %arg5[%c4_39, %c0_40] : memref<8x128xf32, #tpu.memory_space<vmem>>, vector<1x1xf32>
    %48 = vector.broadcast %43 : vector<1x32xf32> to vector<8x32xf32>
    %49 = arith.mulf %41, %48 : vector<8x32xf32>
    %cst = arith.constant dense<0.000000e+00> : vector<8xf32>
    %50 = vector.multi_reduction <add>, %49, %cst [1] : vector<8x32xf32> to vector<8xf32>
    %51 = vector.shape_cast %50 : vector<8xf32> to vector<8x1xf32>
    %52 = vector.shape_cast %44 : vector<1x64xf32> to vector<1x1x64xf32>
    %53 = vector.broadcast %52 : vector<1x1x64xf32> to vector<8x16x64xf32>
    %54 = arith.mulf %40, %53 : vector<8x16x64xf32>
    %cst_41 = arith.constant dense<0.000000e+00> : vector<8x16xf32>
    %55 = vector.multi_reduction <add>, %54, %cst_41 [2] : vector<8x16x64xf32> to vector<8x16xf32>
    %56 = vector.broadcast %51 : vector<8x1xf32> to vector<8x16xf32>
    %57 = arith.addf %56, %55 : vector<8x16xf32>
    %58 = vector.broadcast %47 : vector<1x1xf32> to vector<8x16xf32>
    %59 = arith.addf %57, %58 : vector<8x16xf32>
    %cst_42 = arith.constant dense<0xFF800000> : vector<8xf32>
    %60 = vector.multi_reduction <maximumf>, %59, %cst_42 [1] : vector<8x16xf32> to vector<8xf32>
    %61 = vector.shape_cast %60 : vector<8xf32> to vector<8x1xf32>
    %62 = vector.broadcast %61 : vector<8x1xf32> to vector<8x16xf32>
    %63 = arith.subf %59, %62 : vector<8x16xf32>
    %64 = math.exp %63 : vector<8x16xf32>
    %cst_43 = arith.constant dense<0.000000e+00> : vector<8xf32>
    %65 = vector.multi_reduction <add>, %64, %cst_43 [1] : vector<8x16xf32> to vector<8xf32>
    %66 = vector.shape_cast %65 : vector<8xf32> to vector<8x1xf32>
    %67 = tpu.reciprocal %66 : vector<8x1xf32> -> vector<8x1xf32>
    %68 = vector.broadcast %67 : vector<8x1xf32> to vector<8x16xf32>
    %69 = arith.mulf %64, %68 : vector<8x16xf32>
    %70 = vector.shape_cast %69 : vector<8x16xf32> to vector<8x16x1xf32>
    %71 = vector.broadcast %70 : vector<8x16x1xf32> to vector<8x16x64xf32>
    %72 = arith.mulf %71, %40 : vector<8x16x64xf32>
    %cst_44 = arith.constant dense<0.000000e+00> : vector<8x64xf32>
    %73 = vector.multi_reduction <add>, %72, %cst_44 [1] : vector<8x16x64xf32> to vector<8x64xf32>
    %c0_i32_45 = arith.constant 0 : i32
    %c0_i32_46 = arith.constant 0 : i32
    %74 = tpu.memref_slice %arg6[%0, %c0_i32_46] : memref<64x32xf32, #tpu.memory_space<any>> -> memref<1x32xf32, #tpu.memory_space<any>>
    %c0_i32_47 = arith.constant 0 : i32
    %c0_i32_48 = arith.constant 0 : i32
    %75 = tpu.memref_slice %arg10[%c0_i32_47, %c0_i32_48] : memref<8x32xf32, #tpu.memory_space<vmem>> -> memref<1x32xf32, #tpu.memory_space<vmem>>
    %76 = tpu.memref_slice %arg11[%c0_i32_45] : memref<8x!tpu.dma_semaphore, #tpu.memory_space<semaphore_mem>> -> memref<1x!tpu.dma_semaphore, #tpu.memory_space<semaphore_mem>>
    %77 = tpu.memref_squeeze %76 : memref<1x!tpu.dma_semaphore, #tpu.memory_space<semaphore_mem>> -> memref<!tpu.dma_semaphore, #tpu.memory_space<semaphore_mem>>
    tpu.wait_dma2 semaphore(%77 : memref<!tpu.dma_semaphore, #tpu.memory_space<semaphore_mem>>) src(%74 : memref<1x32xf32, #tpu.memory_space<any>>) dst(%75 : memref<1x32xf32, #tpu.memory_space<vmem>>)
    %c1_i32_49 = arith.constant 1 : i32
    %c0_i32_50 = arith.constant 0 : i32
    %78 = tpu.memref_slice %arg6[%1, %c0_i32_50] : memref<64x32xf32, #tpu.memory_space<any>> -> memref<1x32xf32, #tpu.memory_space<any>>
    %c1_i32_51 = arith.constant 1 : i32
    %c0_i32_52 = arith.constant 0 : i32
    %79 = tpu.memref_slice %arg10[%c1_i32_51, %c0_i32_52] : memref<8x32xf32, #tpu.memory_space<vmem>> -> memref<1x32xf32, #tpu.memory_space<vmem>>
    %80 = tpu.memref_slice %arg11[%c1_i32_49] : memref<8x!tpu.dma_semaphore, #tpu.memory_space<semaphore_mem>> -> memref<1x!tpu.dma_semaphore, #tpu.memory_space<semaphore_mem>>
    %81 = tpu.memref_squeeze %80 : memref<1x!tpu.dma_semaphore, #tpu.memory_space<semaphore_mem>> -> memref<!tpu.dma_semaphore, #tpu.memory_space<semaphore_mem>>
    tpu.wait_dma2 semaphore(%81 : memref<!tpu.dma_semaphore, #tpu.memory_space<semaphore_mem>>) src(%78 : memref<1x32xf32, #tpu.memory_space<any>>) dst(%79 : memref<1x32xf32, #tpu.memory_space<vmem>>)
    %c2_i32_53 = arith.constant 2 : i32
    %c0_i32_54 = arith.constant 0 : i32
    %82 = tpu.memref_slice %arg6[%2, %c0_i32_54] : memref<64x32xf32, #tpu.memory_space<any>> -> memref<1x32xf32, #tpu.memory_space<any>>
    %c2_i32_55 = arith.constant 2 : i32
    %c0_i32_56 = arith.constant 0 : i32
    %83 = tpu.memref_slice %arg10[%c2_i32_55, %c0_i32_56] : memref<8x32xf32, #tpu.memory_space<vmem>> -> memref<1x32xf32, #tpu.memory_space<vmem>>
    %84 = tpu.memref_slice %arg11[%c2_i32_53] : memref<8x!tpu.dma_semaphore, #tpu.memory_space<semaphore_mem>> -> memref<1x!tpu.dma_semaphore, #tpu.memory_space<semaphore_mem>>
    %85 = tpu.memref_squeeze %84 : memref<1x!tpu.dma_semaphore, #tpu.memory_space<semaphore_mem>> -> memref<!tpu.dma_semaphore, #tpu.memory_space<semaphore_mem>>
    tpu.wait_dma2 semaphore(%85 : memref<!tpu.dma_semaphore, #tpu.memory_space<semaphore_mem>>) src(%82 : memref<1x32xf32, #tpu.memory_space<any>>) dst(%83 : memref<1x32xf32, #tpu.memory_space<vmem>>)
    %c3_i32_57 = arith.constant 3 : i32
    %c0_i32_58 = arith.constant 0 : i32
    %86 = tpu.memref_slice %arg6[%3, %c0_i32_58] : memref<64x32xf32, #tpu.memory_space<any>> -> memref<1x32xf32, #tpu.memory_space<any>>
    %c3_i32_59 = arith.constant 3 : i32
    %c0_i32_60 = arith.constant 0 : i32
    %87 = tpu.memref_slice %arg10[%c3_i32_59, %c0_i32_60] : memref<8x32xf32, #tpu.memory_space<vmem>> -> memref<1x32xf32, #tpu.memory_space<vmem>>
    %88 = tpu.memref_slice %arg11[%c3_i32_57] : memref<8x!tpu.dma_semaphore, #tpu.memory_space<semaphore_mem>> -> memref<1x!tpu.dma_semaphore, #tpu.memory_space<semaphore_mem>>
    %89 = tpu.memref_squeeze %88 : memref<1x!tpu.dma_semaphore, #tpu.memory_space<semaphore_mem>> -> memref<!tpu.dma_semaphore, #tpu.memory_space<semaphore_mem>>
    tpu.wait_dma2 semaphore(%89 : memref<!tpu.dma_semaphore, #tpu.memory_space<semaphore_mem>>) src(%86 : memref<1x32xf32, #tpu.memory_space<any>>) dst(%87 : memref<1x32xf32, #tpu.memory_space<vmem>>)
    %c4_i32_61 = arith.constant 4 : i32
    %c0_i32_62 = arith.constant 0 : i32
    %90 = tpu.memref_slice %arg6[%4, %c0_i32_62] : memref<64x32xf32, #tpu.memory_space<any>> -> memref<1x32xf32, #tpu.memory_space<any>>
    %c4_i32_63 = arith.constant 4 : i32
    %c0_i32_64 = arith.constant 0 : i32
    %91 = tpu.memref_slice %arg10[%c4_i32_63, %c0_i32_64] : memref<8x32xf32, #tpu.memory_space<vmem>> -> memref<1x32xf32, #tpu.memory_space<vmem>>
    %92 = tpu.memref_slice %arg11[%c4_i32_61] : memref<8x!tpu.dma_semaphore, #tpu.memory_space<semaphore_mem>> -> memref<1x!tpu.dma_semaphore, #tpu.memory_space<semaphore_mem>>
    %93 = tpu.memref_squeeze %92 : memref<1x!tpu.dma_semaphore, #tpu.memory_space<semaphore_mem>> -> memref<!tpu.dma_semaphore, #tpu.memory_space<semaphore_mem>>
    tpu.wait_dma2 semaphore(%93 : memref<!tpu.dma_semaphore, #tpu.memory_space<semaphore_mem>>) src(%90 : memref<1x32xf32, #tpu.memory_space<any>>) dst(%91 : memref<1x32xf32, #tpu.memory_space<vmem>>)
    %c5_i32_65 = arith.constant 5 : i32
    %c0_i32_66 = arith.constant 0 : i32
    %94 = tpu.memref_slice %arg6[%5, %c0_i32_66] : memref<64x32xf32, #tpu.memory_space<any>> -> memref<1x32xf32, #tpu.memory_space<any>>
    %c5_i32_67 = arith.constant 5 : i32
    %c0_i32_68 = arith.constant 0 : i32
    %95 = tpu.memref_slice %arg10[%c5_i32_67, %c0_i32_68] : memref<8x32xf32, #tpu.memory_space<vmem>> -> memref<1x32xf32, #tpu.memory_space<vmem>>
    %96 = tpu.memref_slice %arg11[%c5_i32_65] : memref<8x!tpu.dma_semaphore, #tpu.memory_space<semaphore_mem>> -> memref<1x!tpu.dma_semaphore, #tpu.memory_space<semaphore_mem>>
    %97 = tpu.memref_squeeze %96 : memref<1x!tpu.dma_semaphore, #tpu.memory_space<semaphore_mem>> -> memref<!tpu.dma_semaphore, #tpu.memory_space<semaphore_mem>>
    tpu.wait_dma2 semaphore(%97 : memref<!tpu.dma_semaphore, #tpu.memory_space<semaphore_mem>>) src(%94 : memref<1x32xf32, #tpu.memory_space<any>>) dst(%95 : memref<1x32xf32, #tpu.memory_space<vmem>>)
    %c6_i32_69 = arith.constant 6 : i32
    %c0_i32_70 = arith.constant 0 : i32
    %98 = tpu.memref_slice %arg6[%6, %c0_i32_70] : memref<64x32xf32, #tpu.memory_space<any>> -> memref<1x32xf32, #tpu.memory_space<any>>
    %c6_i32_71 = arith.constant 6 : i32
    %c0_i32_72 = arith.constant 0 : i32
    %99 = tpu.memref_slice %arg10[%c6_i32_71, %c0_i32_72] : memref<8x32xf32, #tpu.memory_space<vmem>> -> memref<1x32xf32, #tpu.memory_space<vmem>>
    %100 = tpu.memref_slice %arg11[%c6_i32_69] : memref<8x!tpu.dma_semaphore, #tpu.memory_space<semaphore_mem>> -> memref<1x!tpu.dma_semaphore, #tpu.memory_space<semaphore_mem>>
    %101 = tpu.memref_squeeze %100 : memref<1x!tpu.dma_semaphore, #tpu.memory_space<semaphore_mem>> -> memref<!tpu.dma_semaphore, #tpu.memory_space<semaphore_mem>>
    tpu.wait_dma2 semaphore(%101 : memref<!tpu.dma_semaphore, #tpu.memory_space<semaphore_mem>>) src(%98 : memref<1x32xf32, #tpu.memory_space<any>>) dst(%99 : memref<1x32xf32, #tpu.memory_space<vmem>>)
    %c7_i32_73 = arith.constant 7 : i32
    %c0_i32_74 = arith.constant 0 : i32
    %102 = tpu.memref_slice %arg6[%7, %c0_i32_74] : memref<64x32xf32, #tpu.memory_space<any>> -> memref<1x32xf32, #tpu.memory_space<any>>
    %c7_i32_75 = arith.constant 7 : i32
    %c0_i32_76 = arith.constant 0 : i32
    %103 = tpu.memref_slice %arg10[%c7_i32_75, %c0_i32_76] : memref<8x32xf32, #tpu.memory_space<vmem>> -> memref<1x32xf32, #tpu.memory_space<vmem>>
    %104 = tpu.memref_slice %arg11[%c7_i32_73] : memref<8x!tpu.dma_semaphore, #tpu.memory_space<semaphore_mem>> -> memref<1x!tpu.dma_semaphore, #tpu.memory_space<semaphore_mem>>
    %105 = tpu.memref_squeeze %104 : memref<1x!tpu.dma_semaphore, #tpu.memory_space<semaphore_mem>> -> memref<!tpu.dma_semaphore, #tpu.memory_space<semaphore_mem>>
    tpu.wait_dma2 semaphore(%105 : memref<!tpu.dma_semaphore, #tpu.memory_space<semaphore_mem>>) src(%102 : memref<1x32xf32, #tpu.memory_space<any>>) dst(%103 : memref<1x32xf32, #tpu.memory_space<vmem>>)
    %c0_77 = arith.constant 0 : index
    %c0_78 = arith.constant 0 : index
    %106 = vector.load %arg10[%c0_77, %c0_78] : memref<8x32xf32, #tpu.memory_space<vmem>>, vector<8x32xf32>
    %107 = tpu.concatenate %73, %106, %41 in 1 : vector<8x64xf32>, vector<8x32xf32>, vector<8x32xf32> -> vector<8x128xf32>
    %c0_79 = arith.constant 0 : index
    %c0_80 = arith.constant 0 : index
    %108 = vector.load %arg4[%c0_79, %c0_80] : memref<128x192xf32, #tpu.memory_space<vmem>>, vector<128x128xf32>
    %cst_81 = arith.constant dense<0.000000e+00> : vector<8x128xf32>
    %109 = tpu.matmul %107, %108, %cst_81 {dimension_numbers = #tpu.dot_dimension_numbers<[1], [0], [0], [1], [0, 0, 1, 1], [], []>} : vector<8x128xf32>, vector<128x128xf32>, vector<8x128xf32> -> vector<8x128xf32>
    %110 = vector.broadcast %45 : vector<1x128xf32> to vector<8x128xf32>
    %111 = arith.addf %109, %110 : vector<8x128xf32>
    %112 = arith.negf %111 : vector<8x128xf32>
    %113 = math.exp %112 : vector<8x128xf32>
    %cst_82 = arith.constant 1.000000e+00 : f32
    %114 = vector.broadcast %cst_82 : f32 to vector<8x128xf32>
    %115 = arith.addf %114, %113 : vector<8x128xf32>
    %116 = arith.divf %114, %115 : vector<8x128xf32>
    %117 = math.tanh %111 : vector<8x128xf32>
    %118 = vector.extract_strided_slice %116 {offsets = [0, 0], sizes = [8, 32], strides = [1, 1]} : vector<8x128xf32> to vector<8x32xf32>
    %119 = vector.extract_strided_slice %116 {offsets = [0, 32], sizes = [8, 32], strides = [1, 1]} : vector<8x128xf32> to vector<8x32xf32>
    %120 = vector.extract_strided_slice %117 {offsets = [0, 64], sizes = [8, 32], strides = [1, 1]} : vector<8x128xf32> to vector<8x32xf32>
    %121 = vector.extract_strided_slice %116 {offsets = [0, 96], sizes = [8, 32], strides = [1, 1]} : vector<8x128xf32> to vector<8x32xf32>
    %122 = arith.mulf %119, %42 : vector<8x32xf32>
    %123 = arith.mulf %118, %120 : vector<8x32xf32>
    %124 = arith.addf %122, %123 : vector<8x32xf32>
    %125 = math.tanh %124 : vector<8x32xf32>
    %126 = arith.mulf %121, %125 : vector<8x32xf32>
    %c0_83 = arith.constant 0 : index
    %c128 = arith.constant 128 : index
    %127 = vector.load %arg4[%c0_83, %c128] : memref<128x192xf32, #tpu.memory_space<vmem>>, vector<32x64xf32>
    %cst_84 = arith.constant dense<0.000000e+00> : vector<8x64xf32>
    %128 = tpu.matmul %126, %127, %cst_84 {dimension_numbers = #tpu.dot_dimension_numbers<[1], [0], [0], [1], [0, 0, 1, 1], [], []>} : vector<8x32xf32>, vector<32x64xf32>, vector<8x64xf32> -> vector<8x64xf32>
    %129 = vector.broadcast %46 : vector<1x64xf32> to vector<8x64xf32>
    %130 = arith.addf %128, %129 : vector<8x64xf32>
    %c0_85 = arith.constant 0 : index
    %c0_86 = arith.constant 0 : index
    %131 = vector.load %arg7[%c0_85, %c0_86] : memref<8x64xf32, #tpu.memory_space<vmem>>, vector<8x64xf32>
    tpu.vector_store %arg7[%c0_85, %c0_86], %130 {strides = array<i32>} : memref<8x64xf32, #tpu.memory_space<vmem>>, vector<8x64xf32>,
    %c0_87 = arith.constant 0 : index
    %c0_88 = arith.constant 0 : index
    %132 = vector.load %arg8[%c0_87, %c0_88] : memref<8x32xf32, #tpu.memory_space<vmem>>, vector<8x32xf32>
    tpu.vector_store %arg8[%c0_87, %c0_88], %126 {strides = array<i32>} : memref<8x32xf32, #tpu.memory_space<vmem>>, vector<8x32xf32>,
    %c0_89 = arith.constant 0 : index
    %c0_90 = arith.constant 0 : index
    %133 = vector.load %arg9[%c0_89, %c0_90] : memref<8x32xf32, #tpu.memory_space<vmem>>, vector<8x32xf32>
    tpu.vector_store %arg9[%c0_89, %c0_90], %124 {strides = array<i32>} : memref<8x32xf32, #tpu.memory_space<vmem>>, vector<8x32xf32>,
    return
  }
}

</mosaic_0001>

<llo_original>
// kernel: attn_decoder_forward.1
$region0: #{attn_decoder_forward.1}
  #allocation0 [shape = 'u32[]', space=smem, size = 0x4, offset = 0x4, fixed_abs, tag = 'smem constant byte address 0x4 - core index']
  #allocation1 [shape = 'u32[144,128]{1,0:T(1,128)}', space=vmem, size = 0x12000, scoped, tag = 'internal scratch']
  #allocation2 [shape = 'f32[8,32]{1,0:T(8,128)}', space=vmem, size = 0x1000, scoped, tag = 'scratch operand']
  #allocation3 [shape = 's32[8]{0}', space=sflag, size = 0x20, scoped, tag = 'scratch operand']
  #allocation11 [shape = 's32[]', space=sflag, size = 0x4, offset = 0, fixed_abs, tag = 'sflag constant byte address 0x0 - dummy sync flag']
  #allocation12 [shape = 's32[]', space=sflag, size = 0x4, offset = 0, fixed_abs, tag = 'sflag constant byte address 0x0 - dummy sync flag']
  #allocation13 [shape = 's32[]', space=sflag, size = 0x4, offset = 0, fixed_abs, tag = 'sflag constant byte address 0x0 - dummy sync flag']
  #allocation14 [shape = 's32[]', space=sflag, size = 0x4, offset = 0, fixed_abs, tag = 'sflag constant byte address 0x0 - dummy sync flag']
  #allocation15 [shape = 's32[]', space=sflag, size = 0x4, offset = 0, fixed_abs, tag = 'sflag constant byte address 0x0 - dummy sync flag']
  #allocation16 [shape = 's32[]', space=sflag, size = 0x4, offset = 0, fixed_abs, tag = 'sflag constant byte address 0x0 - dummy sync flag']
  #allocation17 [shape = 's32[]', space=sflag, size = 0x4, offset = 0, fixed_abs, tag = 'sflag constant byte address 0x0 - dummy sync flag']
  #allocation18 [shape = 's32[]', space=sflag, size = 0x4, offset = 0, fixed_abs, tag = 'sflag constant byte address 0x0 - dummy sync flag']
  %s0 = inlined_call_operand.vmem [shape: s32[8], index: 0, kind: input, shape index: {}]
  %s1 = inlined_call_operand.vmem [shape: f32[8,16,64], index: 1, kind: input, shape index: {}]
  %s2 = inlined_call_operand.vmem [shape: f32[8,32], index: 2, kind: input, shape index: {}]
  %s3 = inlined_call_operand.vmem [shape: f32[8,32], index: 3, kind: input, shape index: {}]
  %s4 = inlined_call_operand.vmem [shape: f32[128,192], index: 4, kind: input, shape index: {}]
  %s5 = inlined_call_operand.vmem [shape: f32[8,128], index: 5, kind: input, shape index: {}]
  %s6 = inlined_call_operand.vmem [shape: f32[64,32], index: 6, kind: input, shape index: {}]
  %s7 = inlined_call_operand.hbm [shape: f32[8,64], index: 7, kind: output, shape index: {0}]
  %s8 = inlined_call_operand.hbm [shape: f32[8,32], index: 8, kind: output, shape index: {1}]
  %s9 = inlined_call_operand.hbm [shape: f32[8,32], index: 9, kind: output, shape index: {2}]
  %10 = xla_tuple %s7, %s8, %s9
  %s11 = sld [smem:[#allocation0]]
  $region294: #{attn_decoder_forward.1} parent=0
    _
  %s13 = ssub.s32 1, %s11
  %s14 = scalar_select 0, %s13, %s11
  $region1: #{attn_decoder_forward.1} parent=0
    #allocation4 [shape = 'u8[512]{0}', space=smem, size = 0x200, scoped, tag = 'input window, operand 0, single buffered']
    #allocation5 [shape = 's32[1]{0}', space=sflag, size = 0x4, scoped, tag = 'scoped memory for attn_decoder_forward.1']
    #allocation6 [shape = 's32[1]{0}', space=sflag, size = 0x4, scoped, tag = 'scoped memory for attn_decoder_forward.1']
    #allocation7 [shape = 'u8[4096]{0}', space=vmem, size = 0x1000, scoped, tag = 'output window, operand 0, single buffered']
    #allocation8 [shape = 'u8[4096]{0}', space=vmem, size = 0x1000, scoped, tag = 'output window, operand 1, single buffered']
    #allocation9 [shape = 's32[1]{0}', space=sflag, size = 0x4, scoped, tag = 'scoped memory for attn_decoder_forward.1']
    #allocation10 [shape = 'u8[4096]{0}', space=vmem, size = 0x1000, scoped, tag = 'output window, operand 2, single buffered']
    %15 = vsyncpa [#allocation6], 0
    %16 = vsyncpa [#allocation5], 0
    %17 = vsyncpa [#allocation9], 0
    // Predicated region
    $region2: #{attn_decoder_forward.1} parent=1 // pred_check
      _
    $region3: #{attn_decoder_forward.1} parent=1 // pred_check_branch
      %19 = sbr.rel (0) target = $region5
    $region4: #{attn_decoder_forward.1} parent=1 // pred_region
      %s21 = ssub.s32 16, 16
      %22 = vsyncadd [#allocation6], %s21
      %s24 = sshll.u32 %s0, 4
      %s25 = int_to_ptr.vmem [resolvable:$true] %s24
      %27 = dma.vmem_to_smem %s25, 16, [#allocation4], [#allocation6]
    $region5: #{attn_decoder_forward.1} parent=1 // pred_fallthru
      _
    // Predicated region
    $region6: #{attn_decoder_forward.1} parent=1 // pred_check
      _
    $region7: #{attn_decoder_forward.1} parent=1 // pred_check_branch
      %29 = sbr.rel (0) target = $region9
    $region8: #{attn_decoder_forward.1} parent=1 // pred_region
      _
    $region9: #{attn_decoder_forward.1} parent=1 // pred_fallthru
      _
    // Predicated region
    $region10: #{attn_decoder_forward.1} parent=1 // pred_check
      _
    $region11: #{attn_decoder_forward.1} parent=1 // pred_check_branch
      %31 = sbr.rel (0) target = $region13
    $region12: #{attn_decoder_forward.1} parent=1 // pred_region
      _
    $region13: #{attn_decoder_forward.1} parent=1 // pred_fallthru
      _
    // Predicated region
    $region14: #{attn_decoder_forward.1} parent=1 // pred_check
      _
    $region15: #{attn_decoder_forward.1} parent=1 // pred_check_branch
      %33 = sbr.rel (0) target = $region17
    $region16: #{attn_decoder_forward.1} parent=1 // pred_region
      _
    $region17: #{attn_decoder_forward.1} parent=1 // pred_fallthru
      _
    // Predicated region
    $region18: #{attn_decoder_forward.1} parent=1 // pred_check
      _
    $region19: #{attn_decoder_forward.1} parent=1 // pred_check_branch
      %35 = sbr.rel (0) target = $region21
    $region20: #{attn_decoder_forward.1} parent=1 // pred_region
      _
    $region21: #{attn_decoder_forward.1} parent=1 // pred_fallthru
      _
    // Predicated region
    $region22: #{attn_decoder_forward.1} parent=1 // pred_check
      _
    $region23: #{attn_decoder_forward.1} parent=1 // pred_check_branch
      %37 = sbr.rel (0) target = $region25
    $region24: #{attn_decoder_forward.1} parent=1 // pred_region
      _
    $region25: #{attn_decoder_forward.1} parent=1 // pred_fallthru
      _
    // Predicated region
    $region26: #{attn_decoder_forward.1} parent=1 // pred_check
      _
    $region27: #{attn_decoder_forward.1} parent=1 // pred_check_branch
      %39 = sbr.rel (0) target = $region29
    $region28: #{attn_decoder_forward.1} parent=1 // pred_region
      %40 = dma.done [#allocation6], 16
    $region29: #{attn_decoder_forward.1} parent=1 // pred_fallthru
      _
    %41 = sfence
    %s42 = sld [smem:[#allocation4]]
    %s43 = sld [smem:[#allocation4 + $0x1]]
    %s44 = sld [smem:[#allocation4 + $0x2]]
    %s45 = sld [smem:[#allocation4 + $0x3]]
    %s46 = sld [smem:[#allocation4 + $0x4]]
    %s47 = sld [smem:[#allocation4 + $0x5]]
    %s48 = sld [smem:[#allocation4 + $0x6]]
    %s49 = sld [smem:[#allocation4 + $0x7]]
    %s50 = scalar_lea.vmem %s6, %s42
    %p52 = scmp.lt.u32.totalorder 1, 8
    %p53 = pneg %p52
    // Predicated region
    $region30: #{attn_decoder_forward.1} parent=1 // pred_check
      _
    $region31: #{attn_decoder_forward.1} parent=1 // pred_check_branch
      %55 = sbr.rel (%p52) target = $region33
    $region32: #{attn_decoder_forward.1} parent=1 // pred_region
      %s70 = sand.u32 1, 7
      %p71 = scmp.eq.s32.totalorder %s70, 0
      %p72 = pneg %p71
      // Predicated region
      $region45: #{attn_decoder_forward.1} parent=32 // pred_check
        _
      $region46: #{attn_decoder_forward.1} parent=32 // pred_check_branch
        %74 = sbr.rel (%p71) target = $region48
      $region47: #{attn_decoder_forward.1} parent=32 // pred_region
        %s75 = sand.u32 1, 7
        %s76 = ssub.s32 1, %s75
        %s77 = scalar_lea.vmem %s50, %s76
        %s78 = ssub.s32 1, %s75
        %s79 = scalar_lea.vmem [#allocation2], %s78
        %s80 = sshllo.u32 0, %s75
        loop: start=0, step=1, limit=1
        $region49: #{attn_decoder_forward.1} parent=47 // loop_pre_header
          _
        $region50: #{attn_decoder_forward.1} parent=47 // loop_header
          %s82 = sphi 0, %s86
          %p83 = scmp.ge.s32.totalorder %s82, 1
          %s87 = sphi %s77, %s77
          %s88 = sphi %s79, %s79
        $region51: #{attn_decoder_forward.1} parent=47 // loop_header_branch
          %85 = sbr.rel (%p83) target = $region55
        $region52: #{attn_decoder_forward.1} parent=47 // loop_body
          %v89 = vld [vmem:[%s87] sm:%s80]
          %90 = vst [vmem:[%s88] sm:%s80] %v89
        $region53: #{attn_decoder_forward.1} parent=47 // loop_footer
          %s86 = sadd.s32 1, %s82
        $region54: #{attn_decoder_forward.1} parent=47 // loop_footer_branch
          %81 = sbr.rel target = $region50
        $region55: #{attn_decoder_forward.1} parent=47 // loop_exit
          _
      $region48: #{attn_decoder_forward.1} parent=32 // pred_fallthru
        _
    $region33: #{attn_decoder_forward.1} parent=1 // pred_fallthru
      _
    // Predicated region
    $region34: #{attn_decoder_forward.1} parent=1 // pred_check
      %p56 = pneg %p52
    $region35: #{attn_decoder_forward.1} parent=1 // pred_check_branch
      %58 = sbr.rel (%p56) target = $region37
    $region36: #{attn_decoder_forward.1} parent=1 // pred_region
      %s59 = sshllo.u32 0, 1
      loop: start=0, step=1, limit=1
      $region38: #{attn_decoder_forward.1} parent=36 // loop_pre_header
        _
      $region39: #{attn_decoder_forward.1} parent=36 // loop_header
        %s61 = sphi 0, %s65
        %p62 = scmp.ge.s32.totalorder %s61, 1
        %s66 = sphi %s50, %s50
        %s67 = sphi [#allocation2], [#allocation2]
      $region40: #{attn_decoder_forward.1} parent=36 // loop_header_branch
        %64 = sbr.rel (%p62) target = $region44
      $region41: #{attn_decoder_forward.1} parent=36 // loop_body
        %v68 = vld [vmem:[%s66] sm:%s59]
        %69 = vst [vmem:[%s67] sm:%s59] %v68
      $region42: #{attn_decoder_forward.1} parent=36 // loop_footer
        %s65 = sadd.s32 1, %s61
      $region43: #{attn_decoder_forward.1} parent=36 // loop_footer_branch
        %60 = sbr.rel target = $region39
      $region44: #{attn_decoder_forward.1} parent=36 // loop_exit
        _
    $region37: #{attn_decoder_forward.1} parent=1 // pred_fallthru
      _
    // Predicated region
    $region56: #{attn_decoder_forward.1} parent=1 // pred_check
      _
    $region57: #{attn_decoder_forward.1} parent=1 // pred_check_branch
      %93 = sbr.rel (0) target = $region59
    $region58: #{attn_decoder_forward.1} parent=1 // pred_region
      %94 = vsyncadd [#allocation3], 16
    $region59: #{attn_decoder_forward.1} parent=1 // pred_fallthru
      _
    %s95 = scalar_lea.vmem %s6, %s43
    %s96 = scalar_lea.vmem [#allocation2], 1
    %s97 = scalar_lea.sflag [#allocation3], 1
    %p99 = scmp.lt.u32.totalorder 1, 8
    %p100 = pneg %p99
    // Predicated region
    $region60: #{attn_decoder_forward.1} parent=1 // pred_check
      _
    $region61: #{attn_decoder_forward.1} parent=1 // pred_check_branch
      %102 = sbr.rel (%p99) target = $region63
    $region62: #{attn_decoder_forward.1} parent=1 // pred_region
      %s117 = sand.u32 1, 7
      %p118 = scmp.eq.s32.totalorder %s117, 0
      %p119 = pneg %p118
      // Predicated region
      $region75: #{attn_decoder_forward.1} parent=62 // pred_check
        _
      $region76: #{attn_decoder_forward.1} parent=62 // pred_check_branch
        %121 = sbr.rel (%p118) target = $region78
      $region77: #{attn_decoder_forward.1} parent=62 // pred_region
        %s122 = sand.u32 1, 7
        %s123 = ssub.s32 1, %s122
        %s124 = scalar_lea.vmem %s95, %s123
        %s125 = ssub.s32 1, %s122
        %s126 = scalar_lea.vmem %s96, %s125 [#allocation2]
        %s127 = sshllo.u32 0, %s122
        loop: start=0, step=1, limit=1
        $region79: #{attn_decoder_forward.1} parent=77 // loop_pre_header
          _
        $region80: #{attn_decoder_forward.1} parent=77 // loop_header
          %s129 = sphi 0, %s133
          %p130 = scmp.ge.s32.totalorder %s129, 1
          %s134 = sphi %s124, %s124
          %s135 = sphi %s126, %s126
        $region81: #{attn_decoder_forward.1} parent=77 // loop_header_branch
          %132 = sbr.rel (%p130) target = $region85
        $region82: #{attn_decoder_forward.1} parent=77 // loop_body
          %v136 = vld [vmem:[%s134] sm:%s127]
          %137 = vst [vmem:[%s135] sm:%s127] %v136
        $region83: #{attn_decoder_forward.1} parent=77 // loop_footer
          %s133 = sadd.s32 1, %s129
        $region84: #{attn_decoder_forward.1} parent=77 // loop_footer_branch
          %128 = sbr.rel target = $region80
        $region85: #{attn_decoder_forward.1} parent=77 // loop_exit
          _
      $region78: #{attn_decoder_forward.1} parent=62 // pred_fallthru
        _
    $region63: #{attn_decoder_forward.1} parent=1 // pred_fallthru
      _
    // Predicated region
    $region64: #{attn_decoder_forward.1} parent=1 // pred_check
      %p103 = pneg %p99
    $region65: #{attn_decoder_forward.1} parent=1 // pred_check_branch
      %105 = sbr.rel (%p103) target = $region67
    $region66: #{attn_decoder_forward.1} parent=1 // pred_region
      %s106 = sshllo.u32 0, 1
      loop: start=0, step=1, limit=1
      $region68: #{attn_decoder_forward.1} parent=66 // loop_pre_header
        _
      $region69: #{attn_decoder_forward.1} parent=66 // loop_header
        %s108 = sphi 0, %s112
        %p109 = scmp.ge.s32.totalorder %s108, 1
        %s113 = sphi %s95, %s95
        %s114 = sphi %s96, %s96
      $region70: #{attn_decoder_forward.1} parent=66 // loop_header_branch
        %111 = sbr.rel (%p109) target = $region74
      $region71: #{attn_decoder_forward.1} parent=66 // loop_body
        %v115 = vld [vmem:[%s113] sm:%s106]
        %116 = vst [vmem:[%s114] sm:%s106] %v115
      $region72: #{attn_decoder_forward.1} parent=66 // loop_footer
        %s112 = sadd.s32 1, %s108
      $region73: #{attn_decoder_forward.1} parent=66 // loop_footer_branch
        %107 = sbr.rel target = $region69
      $region74: #{attn_decoder_forward.1} parent=66 // loop_exit
        _
    $region67: #{attn_decoder_forward.1} parent=1 // pred_fallthru
      _
    // Predicated region
    $region86: #{attn_decoder_forward.1} parent=1 // pred_check
      _
    $region87: #{attn_decoder_forward.1} parent=1 // pred_check_branch
      %140 = sbr.rel (0) target = $region89
    $region88: #{attn_decoder_forward.1} parent=1 // pred_region
      %141 = vsyncadd %s97, 16
    $region89: #{attn_decoder_forward.1} parent=1 // pred_fallthru
      _
    %s142 = scalar_lea.vmem %s6, %s44
    %s143 = scalar_lea.vmem [#allocation2], 2
    %s144 = scalar_lea.sflag [#allocation3], 2
    %p146 = scmp.lt.u32.totalorder 1, 8
    %p147 = pneg %p146
    // Predicated region
    $region90: #{attn_decoder_forward.1} parent=1 // pred_check
      _
    $region91: #{attn_decoder_forward.1} parent=1 // pred_check_branch
      %149 = sbr.rel (%p146) target = $region93
    $region92: #{attn_decoder_forward.1} parent=1 // pred_region
      %s164 = sand.u32 1, 7
      %p165 = scmp.eq.s32.totalorder %s164, 0
      %p166 = pneg %p165
      // Predicated region
      $region105: #{attn_decoder_forward.1} parent=92 // pred_check
        _
      $region106: #{attn_decoder_forward.1} parent=92 // pred_check_branch
        %168 = sbr.rel (%p165) target = $region108
      $region107: #{attn_decoder_forward.1} parent=92 // pred_region
        %s169 = sand.u32 1, 7
        %s170 = ssub.s32 1, %s169
        %s171 = scalar_lea.vmem %s142, %s170
        %s172 = ssub.s32 1, %s169
        %s173 = scalar_lea.vmem %s143, %s172 [#allocation2]
        %s174 = sshllo.u32 0, %s169
        loop: start=0, step=1, limit=1
        $region109: #{attn_decoder_forward.1} parent=107 // loop_pre_header
          _
        $region110: #{attn_decoder_forward.1} parent=107 // loop_header
          %s176 = sphi 0, %s180
          %p177 = scmp.ge.s32.totalorder %s176, 1
          %s181 = sphi %s171, %s171
          %s182 = sphi %s173, %s173
        $region111: #{attn_decoder_forward.1} parent=107 // loop_header_branch
          %179 = sbr.rel (%p177) target = $region115
        $region112: #{attn_decoder_forward.1} parent=107 // loop_body
          %v183 = vld [vmem:[%s181] sm:%s174]
          %184 = vst [vmem:[%s182] sm:%s174] %v183
        $region113: #{attn_decoder_forward.1} parent=107 // loop_footer
          %s180 = sadd.s32 1, %s176
        $region114: #{attn_decoder_forward.1} parent=107 // loop_footer_branch
          %175 = sbr.rel target = $region110
        $region115: #{attn_decoder_forward.1} parent=107 // loop_exit
          _
      $region108: #{attn_decoder_forward.1} parent=92 // pred_fallthru
        _
    $region93: #{attn_decoder_forward.1} parent=1 // pred_fallthru
      _
    // Predicated region
    $region94: #{attn_decoder_forward.1} parent=1 // pred_check
      %p150 = pneg %p146
    $region95: #{attn_decoder_forward.1} parent=1 // pred_check_branch
      %152 = sbr.rel (%p150) target = $region97
    $region96: #{attn_decoder_forward.1} parent=1 // pred_region
      %s153 = sshllo.u32 0, 1
      loop: start=0, step=1, limit=1
      $region98: #{attn_decoder_forward.1} parent=96 // loop_pre_header
        _
      $region99: #{attn_decoder_forward.1} parent=96 // loop_header
        %s155 = sphi 0, %s159
        %p156 = scmp.ge.s32.totalorder %s155, 1
        %s160 = sphi %s142, %s142
        %s161 = sphi %s143, %s143
      $region100: #{attn_decoder_forward.1} parent=96 // loop_header_branch
        %158 = sbr.rel (%p156) target = $region104
      $region101: #{attn_decoder_forward.1} parent=96 // loop_body
        %v162 = vld [vmem:[%s160] sm:%s153]
        %163 = vst [vmem:[%s161] sm:%s153] %v162
      $region102: #{attn_decoder_forward.1} parent=96 // loop_footer
        %s159 = sadd.s32 1, %s155
      $region103: #{attn_decoder_forward.1} parent=96 // loop_footer_branch
        %154 = sbr.rel target = $region99
      $region104: #{attn_decoder_forward.1} parent=96 // loop_exit
        _
    $region97: #{attn_decoder_forward.1} parent=1 // pred_fallthru
      _
    // Predicated region
    $region116: #{attn_decoder_forward.1} parent=1 // pred_check
      _
    $region117: #{attn_decoder_forward.1} parent=1 // pred_check_branch
      %187 = sbr.rel (0) target = $region119
    $region118: #{attn_decoder_forward.1} parent=1 // pred_region
      %188 = vsyncadd %s144, 16
    $region119: #{attn_decoder_forward.1} parent=1 // pred_fallthru
      _
    %s189 = scalar_lea.vmem %s6, %s45
    %s190 = scalar_lea.vmem [#allocation2], 3
    %s191 = scalar_lea.sflag [#allocation3], 3
    %p193 = scmp.lt.u32.totalorder 1, 8
    %p194 = pneg %p193
    // Predicated region
    $region120: #{attn_decoder_forward.1} parent=1 // pred_check
      _
    $region121: #{attn_decoder_forward.1} parent=1 // pred_check_branch
      %196 = sbr.rel (%p193) target = $region123
    $region122: #{attn_decoder_forward.1} parent=1 // pred_region
      %s211 = sand.u32 1, 7
      %p212 = scmp.eq.s32.totalorder %s211, 0
      %p213 = pneg %p212
      // Predicated region
      $region135: #{attn_decoder_forward.1} parent=122 // pred_check
        _
      $region136: #{attn_decoder_forward.1} parent=122 // pred_check_branch
        %215 = sbr.rel (%p212) target = $region138
      $region137: #{attn_decoder_forward.1} parent=122 // pred_region
        %s216 = sand.u32 1, 7
        %s217 = ssub.s32 1, %s216
        %s218 = scalar_lea.vmem %s189, %s217
        %s219 = ssub.s32 1, %s216
        %s220 = scalar_lea.vmem %s190, %s219 [#allocation2]
        %s221 = sshllo.u32 0, %s216
        loop: start=0, step=1, limit=1
        $region139: #{attn_decoder_forward.1} parent=137 // loop_pre_header
          _
        $region140: #{attn_decoder_forward.1} parent=137 // loop_header
          %s223 = sphi 0, %s227
          %p224 = scmp.ge.s32.totalorder %s223, 1
          %s228 = sphi %s218, %s218
          %s229 = sphi %s220, %s220
        $region141: #{attn_decoder_forward.1} parent=137 // loop_header_branch
          %226 = sbr.rel (%p224) target = $region145
        $region142: #{attn_decoder_forward.1} parent=137 // loop_body
          %v230 = vld [vmem:[%s228] sm:%s221]
          %231 = vst [vmem:[%s229] sm:%s221] %v230
        $region143: #{attn_decoder_forward.1} parent=137 // loop_footer
          %s227 = sadd.s32 1, %s223
        $region144: #{attn_decoder_forward.1} parent=137 // loop_footer_branch
          %222 = sbr.rel target = $region140
        $region145: #{attn_decoder_forward.1} parent=137 // loop_exit
          _
      $region138: #{attn_decoder_forward.1} parent=122 // pred_fallthru
        _
    $region123: #{attn_decoder_forward.1} parent=1 // pred_fallthru
      _
    // Predicated region
    $region124: #{attn_decoder_forward.1} parent=1 // pred_check
      %p197 = pneg %p193
    $region125: #{attn_decoder_forward.1} parent=1 // pred_check_branch
      %199 = sbr.rel (%p197) target = $region127
    $region126: #{attn_decoder_forward.1} parent=1 // pred_region
      %s200 = sshllo.u32 0, 1
      loop: start=0, step=1, limit=1
      $region128: #{attn_decoder_forward.1} parent=126 // loop_pre_header
        _
      $region129: #{attn_decoder_forward.1} parent=126 // loop_header
        %s202 = sphi 0, %s206
        %p203 = scmp.ge.s32.totalorder %s202, 1
        %s207 = sphi %s189, %s189
        %s208 = sphi %s190, %s190
      $region130: #{attn_decoder_forward.1} parent=126 // loop_header_branch
        %205 = sbr.rel (%p203) target = $region134
      $region131: #{attn_decoder_forward.1} parent=126 // loop_body
        %v209 = vld [vmem:[%s207] sm:%s200]
        %210 = vst [vmem:[%s208] sm:%s200] %v209
      $region132: #{attn_decoder_forward.1} parent=126 // loop_footer
        %s206 = sadd.s32 1, %s202
      $region133: #{attn_decoder_forward.1} parent=126 // loop_footer_branch
        %201 = sbr.rel target = $region129
      $region134: #{attn_decoder_forward.1} parent=126 // loop_exit
        _
    $region127: #{attn_decoder_forward.1} parent=1 // pred_fallthru
      _
    // Predicated region
    $region146: #{attn_decoder_forward.1} parent=1 // pred_check
      _
    $region147: #{attn_decoder_forward.1} parent=1 // pred_check_branch
      %234 = sbr.rel (0) target = $region149
    $region148: #{attn_decoder_forward.1} parent=1 // pred_region
      %235 = vsyncadd %s191, 16
    $region149: #{attn_decoder_forward.1} parent=1 // pred_fallthru
      _
    %s236 = scalar_lea.vmem %s6, %s46
    %s237 = scalar_lea.vmem [#allocation2], 4
    %s238 = scalar_lea.sflag [#allocation3], 4
    %p240 = scmp.lt.u32.totalorder 1, 8
    %p241 = pneg %p240
    // Predicated region
    $region150: #{attn_decoder_forward.1} parent=1 // pred_check
      _
    $region151: #{attn_decoder_forward.1} parent=1 // pred_check_branch
      %243 = sbr.rel (%p240) target = $region153
    $region152: #{attn_decoder_forward.1} parent=1 // pred_region
      %s258 = sand.u32 1, 7
      %p259 = scmp.eq.s32.totalorder %s258, 0
      %p260 = pneg %p259
      // Predicated region
      $region165: #{attn_decoder_forward.1} parent=152 // pred_check
        _
      $region166: #{attn_decoder_forward.1} parent=152 // pred_check_branch
        %262 = sbr.rel (%p259) target = $region168
      $region167: #{attn_decoder_forward.1} parent=152 // pred_region
        %s263 = sand.u32 1, 7
        %s264 = ssub.s32 1, %s263
        %s265 = scalar_lea.vmem %s236, %s264
        %s266 = ssub.s32 1, %s263
        %s267 = scalar_lea.vmem %s237, %s266 [#allocation2]
        %s268 = sshllo.u32 0, %s263
        loop: start=0, step=1, limit=1
        $region169: #{attn_decoder_forward.1} parent=167 // loop_pre_header
          _
        $region170: #{attn_decoder_forward.1} parent=167 // loop_header
          %s270 = sphi 0, %s274
          %p271 = scmp.ge.s32.totalorder %s270, 1
          %s275 = sphi %s265, %s265
          %s276 = sphi %s267, %s267
        $region171: #{attn_decoder_forward.1} parent=167 // loop_header_branch
          %273 = sbr.rel (%p271) target = $region175
        $region172: #{attn_decoder_forward.1} parent=167 // loop_body
          %v277 = vld [vmem:[%s275] sm:%s268]
          %278 = vst [vmem:[%s276] sm:%s268] %v277
        $region173: #{attn_decoder_forward.1} parent=167 // loop_footer
          %s274 = sadd.s32 1, %s270
        $region174: #{attn_decoder_forward.1} parent=167 // loop_footer_branch
          %269 = sbr.rel target = $region170
        $region175: #{attn_decoder_forward.1} parent=167 // loop_exit
          _
      $region168: #{attn_decoder_forward.1} parent=152 // pred_fallthru
        _
    $region153: #{attn_decoder_forward.1} parent=1 // pred_fallthru
      _
    // Predicated region
    $region154: #{attn_decoder_forward.1} parent=1 // pred_check
      %p244 = pneg %p240
    $region155: #{attn_decoder_forward.1} parent=1 // pred_check_branch
      %246 = sbr.rel (%p244) target = $region157
    $region156: #{attn_decoder_forward.1} parent=1 // pred_region
      %s247 = sshllo.u32 0, 1
      loop: start=0, step=1, limit=1
      $region158: #{attn_decoder_forward.1} parent=156 // loop_pre_header
        _
      $region159: #{attn_decoder_forward.1} parent=156 // loop_header
        %s249 = sphi 0, %s253
        %p250 = scmp.ge.s32.totalorder %s249, 1
        %s254 = sphi %s236, %s236
        %s255 = sphi %s237, %s237
      $region160: #{attn_decoder_forward.1} parent=156 // loop_header_branch
        %252 = sbr.rel (%p250) target = $region164
      $region161: #{attn_decoder_forward.1} parent=156 // loop_body
        %v256 = vld [vmem:[%s254] sm:%s247]
        %257 = vst [vmem:[%s255] sm:%s247] %v256
      $region162: #{attn_decoder_forward.1} parent=156 // loop_footer
        %s253 = sadd.s32 1, %s249
      $region163: #{attn_decoder_forward.1} parent=156 // loop_footer_branch
        %248 = sbr.rel target = $region159
      $region164: #{attn_decoder_forward.1} parent=156 // loop_exit
        _
    $region157: #{attn_decoder_forward.1} parent=1 // pred_fallthru
      _
    // Predicated region
    $region176: #{attn_decoder_forward.1} parent=1 // pred_check
      _
    $region177: #{attn_decoder_forward.1} parent=1 // pred_check_branch
      %281 = sbr.rel (0) target = $region179
    $region178: #{attn_decoder_forward.1} parent=1 // pred_region
      %282 = vsyncadd %s238, 16
    $region179: #{attn_decoder_forward.1} parent=1 // pred_fallthru
      _
    %s283 = scalar_lea.vmem %s6, %s47
    %s284 = scalar_lea.vmem [#allocation2], 5
    %s285 = scalar_lea.sflag [#allocation3], 5
    %p287 = scmp.lt.u32.totalorder 1, 8
    %p288 = pneg %p287
    // Predicated region
    $region180: #{attn_decoder_forward.1} parent=1 // pred_check
      _
    $region181: #{attn_decoder_forward.1} parent=1 // pred_check_branch
      %290 = sbr.rel (%p287) target = $region183
    $region182: #{attn_decoder_forward.1} parent=1 // pred_region
      %s305 = sand.u32 1, 7
      %p306 = scmp.eq.s32.totalorder %s305, 0
      %p307 = pneg %p306
      // Predicated region
      $region195: #{attn_decoder_forward.1} parent=182 // pred_check
        _
      $region196: #{attn_decoder_forward.1} parent=182 // pred_check_branch
        %309 = sbr.rel (%p306) target = $region198
      $region197: #{attn_decoder_forward.1} parent=182 // pred_region
        %s310 = sand.u32 1, 7
        %s311 = ssub.s32 1, %s310
        %s312 = scalar_lea.vmem %s283, %s311
        %s313 = ssub.s32 1, %s310
        %s314 = scalar_lea.vmem %s284, %s313 [#allocation2]
        %s315 = sshllo.u32 0, %s310
        loop: start=0, step=1, limit=1
        $region199: #{attn_decoder_forward.1} parent=197 // loop_pre_header
          _
        $region200: #{attn_decoder_forward.1} parent=197 // loop_header
          %s317 = sphi 0, %s321
          %p318 = scmp.ge.s32.totalorder %s317, 1
          %s322 = sphi %s312, %s312
          %s323 = sphi %s314, %s314
        $region201: #{attn_decoder_forward.1} parent=197 // loop_header_branch
          %320 = sbr.rel (%p318) target = $region205
        $region202: #{attn_decoder_forward.1} parent=197 // loop_body
          %v324 = vld [vmem:[%s322] sm:%s315]
          %325 = vst [vmem:[%s323] sm:%s315] %v324
        $region203: #{attn_decoder_forward.1} parent=197 // loop_footer
          %s321 = sadd.s32 1, %s317
        $region204: #{attn_decoder_forward.1} parent=197 // loop_footer_branch
          %316 = sbr.rel target = $region200
        $region205: #{attn_decoder_forward.1} parent=197 // loop_exit
          _
      $region198: #{attn_decoder_forward.1} parent=182 // pred_fallthru
        _
    $region183: #{attn_decoder_forward.1} parent=1 // pred_fallthru
      _
    // Predicated region
    $region184: #{attn_decoder_forward.1} parent=1 // pred_check
      %p291 = pneg %p287
    $region185: #{attn_decoder_forward.1} parent=1 // pred_check_branch
      %293 = sbr.rel (%p291) target = $region187
    $region186: #{attn_decoder_forward.1} parent=1 // pred_region
      %s294 = sshllo.u32 0, 1
      loop: start=0, step=1, limit=1
      $region188: #{attn_decoder_forward.1} parent=186 // loop_pre_header
        _
      $region189: #{attn_decoder_forward.1} parent=186 // loop_header
        %s296 = sphi 0, %s300
        %p297 = scmp.ge.s32.totalorder %s296, 1
        %s301 = sphi %s283, %s283
        %s302 = sphi %s284, %s284
      $region190: #{attn_decoder_forward.1} parent=186 // loop_header_branch
        %299 = sbr.rel (%p297) target = $region194
      $region191: #{attn_decoder_forward.1} parent=186 // loop_body
        %v303 = vld [vmem:[%s301] sm:%s294]
        %304 = vst [vmem:[%s302] sm:%s294] %v303
      $region192: #{attn_decoder_forward.1} parent=186 // loop_footer
        %s300 = sadd.s32 1, %s296
      $region193: #{attn_decoder_forward.1} parent=186 // loop_footer_branch
        %295 = sbr.rel target = $region189
      $region194: #{attn_decoder_forward.1} parent=186 // loop_exit
        _
    $region187: #{attn_decoder_forward.1} parent=1 // pred_fallthru
      _
    // Predicated region
    $region206: #{attn_decoder_forward.1} parent=1 // pred_check
      _
    $region207: #{attn_decoder_forward.1} parent=1 // pred_check_branch
      %328 = sbr.rel (0) target = $region209
    $region208: #{attn_decoder_forward.1} parent=1 // pred_region
      %329 = vsyncadd %s285, 16
    $region209: #{attn_decoder_forward.1} parent=1 // pred_fallthru
      _
    %s330 = scalar_lea.vmem %s6, %s48
    %s331 = scalar_lea.vmem [#allocation2], 6
    %s332 = scalar_lea.sflag [#allocation3], 6
    %p334 = scmp.lt.u32.totalorder 1, 8
    %p335 = pneg %p334
    // Predicated region
    $region210: #{attn_decoder_forward.1} parent=1 // pred_check
      _
    $region211: #{attn_decoder_forward.1} parent=1 // pred_check_branch
      %337 = sbr.rel (%p334) target = $region213
    $region212: #{attn_decoder_forward.1} parent=1 // pred_region
      %s352 = sand.u32 1, 7
      %p353 = scmp.eq.s32.totalorder %s352, 0
      %p354 = pneg %p353
      // Predicated region
      $region225: #{attn_decoder_forward.1} parent=212 // pred_check
        _
      $region226: #{attn_decoder_forward.1} parent=212 // pred_check_branch
        %356 = sbr.rel (%p353) target = $region228
      $region227: #{attn_decoder_forward.1} parent=212 // pred_region
        %s357 = sand.u32 1, 7
        %s358 = ssub.s32 1, %s357
        %s359 = scalar_lea.vmem %s330, %s358
        %s360 = ssub.s32 1, %s357
        %s361 = scalar_lea.vmem %s331, %s360 [#allocation2]
        %s362 = sshllo.u32 0, %s357
        loop: start=0, step=1, limit=1
        $region229: #{attn_decoder_forward.1} parent=227 // loop_pre_header
          _
        $region230: #{attn_decoder_forward.1} parent=227 // loop_header
          %s364 = sphi 0, %s368
          %p365 = scmp.ge.s32.totalorder %s364, 1
          %s369 = sphi %s359, %s359
          %s370 = sphi %s361, %s361
        $region231: #{attn_decoder_forward.1} parent=227 // loop_header_branch
          %367 = sbr.rel (%p365) target = $region235
        $region232: #{attn_decoder_forward.1} parent=227 // loop_body
          %v371 = vld [vmem:[%s369] sm:%s362]
          %372 = vst [vmem:[%s370] sm:%s362] %v371
        $region233: #{attn_decoder_forward.1} parent=227 // loop_footer
          %s368 = sadd.s32 1, %s364
        $region234: #{attn_decoder_forward.1} parent=227 // loop_footer_branch
          %363 = sbr.rel target = $region230
        $region235: #{attn_decoder_forward.1} parent=227 // loop_exit
          _
      $region228: #{attn_decoder_forward.1} parent=212 // pred_fallthru
        _
    $region213: #{attn_decoder_forward.1} parent=1 // pred_fallthru
      _
    // Predicated region
    $region214: #{attn_decoder_forward.1} parent=1 // pred_check
      %p338 = pneg %p334
    $region215: #{attn_decoder_forward.1} parent=1 // pred_check_branch
      %340 = sbr.rel (%p338) target = $region217
    $region216: #{attn_decoder_forward.1} parent=1 // pred_region
      %s341 = sshllo.u32 0, 1
      loop: start=0, step=1, limit=1
      $region218: #{attn_decoder_forward.1} parent=216 // loop_pre_header
        _
      $region219: #{attn_decoder_forward.1} parent=216 // loop_header
        %s343 = sphi 0, %s347
        %p344 = scmp.ge.s32.totalorder %s343, 1
        %s348 = sphi %s330, %s330
        %s349 = sphi %s331, %s331
      $region220: #{attn_decoder_forward.1} parent=216 // loop_header_branch
        %346 = sbr.rel (%p344) target = $region224
      $region221: #{attn_decoder_forward.1} parent=216 // loop_body
        %v350 = vld [vmem:[%s348] sm:%s341]
        %351 = vst [vmem:[%s349] sm:%s341] %v350
      $region222: #{attn_decoder_forward.1} parent=216 // loop_footer
        %s347 = sadd.s32 1, %s343
      $region223: #{attn_decoder_forward.1} parent=216 // loop_footer_branch
        %342 = sbr.rel target = $region219
      $region224: #{attn_decoder_forward.1} parent=216 // loop_exit
        _
    $region217: #{attn_decoder_forward.1} parent=1 // pred_fallthru
      _
    // Predicated region
    $region236: #{attn_decoder_forward.1} parent=1 // pred_check
      _
    $region237: #{attn_decoder_forward.1} parent=1 // pred_check_branch
      %375 = sbr.rel (0) target = $region239
    $region238: #{attn_decoder_forward.1} parent=1 // pred_region
      %376 = vsyncadd %s332, 16
    $region239: #{attn_decoder_forward.1} parent=1 // pred_fallthru
      _
    %s377 = scalar_lea.vmem %s6, %s49
    %s378 = scalar_lea.vmem [#allocation2], 7
    %s379 = scalar_lea.sflag [#allocation3], 7
    %p381 = scmp.lt.u32.totalorder 1, 8
    %p382 = pneg %p381
    // Predicated region
    $region240: #{attn_decoder_forward.1} parent=1 // pred_check
      _
    $region241: #{attn_decoder_forward.1} parent=1 // pred_check_branch
      %384 = sbr.rel (%p381) target = $region243
    $region242: #{attn_decoder_forward.1} parent=1 // pred_region
      %s399 = sand.u32 1, 7
      %p400 = scmp.eq.s32.totalorder %s399, 0
      %p401 = pneg %p400
      // Predicated region
      $region255: #{attn_decoder_forward.1} parent=242 // pred_check
        _
      $region256: #{attn_decoder_forward.1} parent=242 // pred_check_branch
        %403 = sbr.rel (%p400) target = $region258
      $region257: #{attn_decoder_forward.1} parent=242 // pred_region
        %s404 = sand.u32 1, 7
        %s405 = ssub.s32 1, %s404
        %s406 = scalar_lea.vmem %s377, %s405
        %s407 = ssub.s32 1, %s404
        %s408 = scalar_lea.vmem %s378, %s407 [#allocation2]
        %s409 = sshllo.u32 0, %s404
        loop: start=0, step=1, limit=1
        $region259: #{attn_decoder_forward.1} parent=257 // loop_pre_header
          _
        $region260: #{attn_decoder_forward.1} parent=257 // loop_header
          %s411 = sphi 0, %s415
          %p412 = scmp.ge.s32.totalorder %s411, 1
          %s416 = sphi %s406, %s406
          %s417 = sphi %s408, %s408
        $region261: #{attn_decoder_forward.1} parent=257 // loop_header_branch
          %414 = sbr.rel (%p412) target = $region265
        $region262: #{attn_decoder_forward.1} parent=257 // loop_body
          %v418 = vld [vmem:[%s416] sm:%s409]
          %419 = vst [vmem:[%s417] sm:%s409] %v418
        $region263: #{attn_decoder_forward.1} parent=257 // loop_footer
          %s415 = sadd.s32 1, %s411
        $region264: #{attn_decoder_forward.1} parent=257 // loop_footer_branch
          %410 = sbr.rel target = $region260
        $region265: #{attn_decoder_forward.1} parent=257 // loop_exit
          _
      $region258: #{attn_decoder_forward.1} parent=242 // pred_fallthru
        _
    $region243: #{attn_decoder_forward.1} parent=1 // pred_fallthru
      _
    // Predicated region
    $region244: #{attn_decoder_forward.1} parent=1 // pred_check
      %p385 = pneg %p381
    $region245: #{attn_decoder_forward.1} parent=1 // pred_check_branch
      %387 = sbr.rel (%p385) target = $region247
    $region246: #{attn_decoder_forward.1} parent=1 // pred_region
      %s388 = sshllo.u32 0, 1
      loop: start=0, step=1, limit=1
      $region248: #{attn_decoder_forward.1} parent=246 // loop_pre_header
        _
      $region249: #{attn_decoder_forward.1} parent=246 // loop_header
        %s390 = sphi 0, %s394
        %p391 = scmp.ge.s32.totalorder %s390, 1
        %s395 = sphi %s377, %s377
        %s396 = sphi %s378, %s378
      $region250: #{attn_decoder_forward.1} parent=246 // loop_header_branch
        %393 = sbr.rel (%p391) target = $region254
      $region251: #{attn_decoder_forward.1} parent=246 // loop_body
        %v397 = vld [vmem:[%s395] sm:%s388]
        %398 = vst [vmem:[%s396] sm:%s388] %v397
      $region252: #{attn_decoder_forward.1} parent=246 // loop_footer
        %s394 = sadd.s32 1, %s390
      $region253: #{attn_decoder_forward.1} parent=246 // loop_footer_branch
        %389 = sbr.rel target = $region249
      $region254: #{attn_decoder_forward.1} parent=246 // loop_exit
        _
    $region247: #{attn_decoder_forward.1} parent=1 // pred_fallthru
      _
    // Predicated region
    $region266: #{attn_decoder_forward.1} parent=1 // pred_check
      _
    $region267: #{attn_decoder_forward.1} parent=1 // pred_check_branch
      %422 = sbr.rel (0) target = $region269
    $region268: #{attn_decoder_forward.1} parent=1 // pred_region
      %423 = vsyncadd %s379, 16
    $region269: #{attn_decoder_forward.1} parent=1 // pred_fallthru
      _
    %v424 = vld [vmem:[%s1] sm:$0xff]
    %v425 = vld [vmem:[%s1 + $0x8] sm:$0xff]
    %v426 = vld [vmem:[%s1 + $0x10] sm:$0xff]
    %v427 = vld [vmem:[%s1 + $0x18] sm:$0xff]
    %v428 = vld [vmem:[%s1 + $0x20] sm:$0xff]
    %v429 = vld [vmem:[%s1 + $0x28] sm:$0xff]
    %v430 = vld [vmem:[%s1 + $0x30] sm:$0xff]
    %v431 = vld [vmem:[%s1 + $0x38] sm:$0xff]
    %v432 = vld [vmem:[%s1 + $0x40] sm:$0xff]
    %v433 = vld [vmem:[%s1 + $0x48] sm:$0xff]
    %v434 = vld [vmem:[%s1 + $0x50] sm:$0xff]
    %v435 = vld [vmem:[%s1 + $0x58] sm:$0xff]
    %v436 = vld [vmem:[%s1 + $0x60] sm:$0xff]
    %v437 = vld [vmem:[%s1 + $0x68] sm:$0xff]
    %v438 = vld [vmem:[%s1 + $0x70] sm:$0xff]
    %v439 = vld [vmem:[%s1 + $0x78] sm:$0xff]
    %v440 = vld [vmem:[%s2] sm:$0xff]
    %v441 = vld [vmem:[%s3] sm:$0xff]
    %v442 = vld [vmem:[%s5] sm:$0x1]
    %v443 = vld [vmem:[%s5 + $0x1] sm:$0x1]
    %v444 = vld [vmem:[%s5 + $0x2] sm:$0x1]
    %v445 = vld [vmem:[%s5 + $0x3] sm:$0x1]
    %v446 = vld [vmem:[%s5 + $0x4] sm:$0x1]
    %v447 = vlaneseq
    %v448 = vshrl.u32 %v447, 7
    %v449 = vsub.s32 0, %v448
    %v450 = vrot.slane %v442, %v449
    %v451 = vmul.f32 %v440, %v450
    %vm452 = vcmask 261120
    %v453 = vsel %vm452, %v451, 0.0
    %454 = vadd.xlane.f32.xlu0 %v453
    %v455 = vpop.xlane.xlu0 %454
    %v456 = vlaneseq
    %v457 = vshrl.u32 %v456, 7
    %v458 = vsub.s32 0, %v457
    %v459 = vrot.slane %v443, %v458
    %v460 = vmul.f32 %v424, %v459
    %v461 = vmul.f32 %v425, %v459
    %v462 = vmul.f32 %v426, %v459
    %v463 = vmul.f32 %v427, %v459
    %v464 = vmul.f32 %v428, %v459
    %v465 = vmul.f32 %v429, %v459
    %v466 = vmul.f32 %v430, %v459
    %v467 = vmul.f32 %v431, %v459
    %v468 = vmul.f32 %v432, %v459
    %v469 = vmul.f32 %v433, %v459
    %v470 = vmul.f32 %v434, %v459
    %v471 = vmul.f32 %v435, %v459
    %v472 = vmul.f32 %v436, %v459
    %v473 = vmul.f32 %v437, %v459
    %v474 = vmul.f32 %v438, %v459
    %v475 = vmul.f32 %v439, %v459
    %vm476 = vcmask 523264
    %v477 = vsel %vm476, %v460, 0.0
    %478 = vadd.xlane.f32.xlu0 %v477
    %v479 = vpop.xlane.xlu0 %478
    %v480 = vsel %vm476, %v461, 0.0
    %481 = vadd.xlane.f32.xlu0 %v480
    %v482 = vpop.xlane.xlu0 %481
    %v483 = vsel %vm476, %v462, 0.0
    %484 = vadd.xlane.f32.xlu0 %v483
    %v485 = vpop.xlane.xlu0 %484
    %v486 = vsel %vm476, %v463, 0.0
    %487 = vadd.xlane.f32.xlu0 %v486
    %v488 = vpop.xlane.xlu0 %487
    %v489 = vsel %vm476, %v464, 0.0
    %490 = vadd.xlane.f32.xlu0 %v489
    %v491 = vpop.xlane.xlu0 %490
    %v492 = vsel %vm476, %v465, 0.0
    %493 = vadd.xlane.f32.xlu0 %v492
    %v494 = vpop.xlane.xlu0 %493
    %v495 = vsel %vm476, %v466, 0.0
    %496 = vadd.xlane.f32.xlu0 %v495
    %v497 = vpop.xlane.xlu0 %496
    %v498 = vsel %vm476, %v467, 0.0
    %499 = vadd.xlane.f32.xlu0 %v498
    %v500 = vpop.xlane.xlu0 %499
    %v501 = vsel %vm476, %v468, 0.0
    %502 = vadd.xlane.f32.xlu0 %v501
    %v503 = vpop.xlane.xlu0 %502
    %v504 = vsel %vm476, %v469, 0.0
    %505 = vadd.xlane.f32.xlu0 %v504
    %v506 = vpop.xlane.xlu0 %505
    %v507 = vsel %vm476, %v470, 0.0
    %508 = vadd.xlane.f32.xlu0 %v507
    %v509 = vpop.xlane.xlu0 %508
    %v510 = vsel %vm476, %v471, 0.0
    %511 = vadd.xlane.f32.xlu0 %v510
    %v512 = vpop.xlane.xlu0 %511
    %v513 = vsel %vm476, %v472, 0.0
    %514 = vadd.xlane.f32.xlu0 %v513
    %v515 = vpop.xlane.xlu0 %514
    %v516 = vsel %vm476, %v473, 0.0
    %517 = vadd.xlane.f32.xlu0 %v516
    %v518 = vpop.xlane.xlu0 %517
    %v519 = vsel %vm476, %v474, 0.0
    %520 = vadd.xlane.f32.xlu0 %v519
    %v521 = vpop.xlane.xlu0 %520
    %v522 = vsel %vm476, %v475, 0.0
    %523 = vadd.xlane.f32.xlu0 %v522
    %v524 = vpop.xlane.xlu0 %523
    %v541 = vlaneseq
    %v542 = vand.u32 %v541, 127
    %v543 = vlaneseq
    %v544 = vshrl.u32 %v543, 7
    %v545 = vsub.s32 %v542, %v544
    %v546 = vrot.slane %v479, %v545
    %v547 = vadd.s32 %v542, 4294967288
    %v548 = vlaneseq
    %v549 = vshrl.u32 %v548, 7
    %v550 = vsub.s32 %v547, %v549
    %v551 = vrot.slane %v482, %v550
    %vm552 = vcmask 130112
    %v553 = vsel %vm552, %v551, %v546
    %v554 = vlaneseq
    %v555 = vshrl.u32 %v554, 7
    %v556 = vsub.s32 %v542, %v555
    %v557 = vrot.slane %v485, %v556
    %v558 = vlaneseq
    %v559 = vshrl.u32 %v558, 7
    %v560 = vsub.s32 %v547, %v559
    %v561 = vrot.slane %v488, %v560
    %v562 = vsel %vm552, %v561, %v557
    %v563 = vlaneseq
    %v564 = vshrl.u32 %v563, 7
    %v565 = vsub.s32 %v542, %v564
    %v566 = vrot.slane %v491, %v565
    %v567 = vlaneseq
    %v568 = vshrl.u32 %v567, 7
    %v569 = vsub.s32 %v547, %v568
    %v570 = vrot.slane %v494, %v569
    %v571 = vsel %vm552, %v570, %v566
    %v572 = vlaneseq
    %v573 = vshrl.u32 %v572, 7
    %v574 = vsub.s32 %v542, %v573
    %v575 = vrot.slane %v497, %v574
    %v576 = vlaneseq
    %v577 = vshrl.u32 %v576, 7
    %v578 = vsub.s32 %v547, %v577
    %v579 = vrot.slane %v500, %v578
    %v580 = vsel %vm552, %v579, %v575
    %v581 = vlaneseq
    %v582 = vshrl.u32 %v581, 7
    %v583 = vsub.s32 %v542, %v582
    %v584 = vrot.slane %v503, %v583
    %v585 = vlaneseq
    %v586 = vshrl.u32 %v585, 7
    %v587 = vsub.s32 %v547, %v586
    %v588 = vrot.slane %v506, %v587
    %v589 = vsel %vm552, %v588, %v584
    %v590 = vlaneseq
    %v591 = vshrl.u32 %v590, 7
    %v592 = vsub.s32 %v542, %v591
    %v593 = vrot.slane %v509, %v592
    %v594 = vlaneseq
    %v595 = vshrl.u32 %v594, 7
    %v596 = vsub.s32 %v547, %v595
    %v597 = vrot.slane %v512, %v596
    %v598 = vsel %vm552, %v597, %v593
    %v599 = vlaneseq
    %v600 = vshrl.u32 %v599, 7
    %v601 = vsub.s32 %v542, %v600
    %v602 = vrot.slane %v515, %v601
    %v603 = vlaneseq
    %v604 = vshrl.u32 %v603, 7
    %v605 = vsub.s32 %v547, %v604
    %v606 = vrot.slane %v518, %v605
    %v607 = vsel %vm552, %v606, %v602
    %v608 = vlaneseq
    %v609 = vshrl.u32 %v608, 7
    %v610 = vsub.s32 %v542, %v609
    %v611 = vrot.slane %v521, %v610
    %v612 = vlaneseq
    %v613 = vshrl.u32 %v612, 7
    %v614 = vsub.s32 %v547, %v613
    %v615 = vrot.slane %v524, %v614
    %v616 = vsel %vm552, %v615, %v611
    %vm617 = vcmask 1041409
    %v618 = vsel %vm617, %v562, %v553
    %vm619 = vcmask 1042434
    %v620 = vsel %vm619, %v571, %v618
    %vm621 = vcmask 1043459
    %v622 = vsel %vm621, %v580, %v620
    %vm623 = vcmask 1044484
    %v624 = vsel %vm623, %v589, %v622
    %vm625 = vcmask 1045509
    %v626 = vsel %vm625, %v598, %v624
    %vm627 = vcmask 1046534
    %v628 = vsel %vm627, %v607, %v626
    %vm629 = vcmask 1047559
    %v630 = vsel %vm629, %v616, %v628
    %v632 = vadd.f32 %v455, %v630
    %s634 = vtos %v446
    %v635 = vstv %s634
    %v637 = vadd.f32 %v632, %v635
    %vm638 = vcmask 130048
    %v639 = vsel %vm638, %v637, -inf
    %640 = vmax.xlane.f32.xlu0 %v639
    %v641 = vpop.xlane.xlu0 %640
    %v642 = vsub.f32 %v637, %v641
    %v643 = vmul.f32 %v642, 1.442695
    %v644 = vpow.pop %v643
    %v645 = vsel %vm638, %v644, 0.0
    %646 = vadd.xlane.f32.xlu0 %v645
    %v647 = vpop.xlane.xlu0 %646
    %v648 = vrcp.pop %v647
    %v649 = vmul.f32 %v644, %v648
    %v650 = vlaneseq
    %v651 = vshrl.u32 %v650, 7
    %v652 = vsub.s32 0, %v651
    %v653 = vrot.slane %v649, %v652
    %655 = vbcast.lane.b32.xlu0 %v653, 256
    %v656 = vpop.permute.xlu0 %655
    %s658 = sor.u32 256, 8
    %659 = vbcast.lane.b32.xlu0 %v653, %s658
    %v660 = vpop.permute.xlu0 %659
    %v661 = vlaneseq
    %v662 = vshrl.u32 %v661, 7
    %v663 = vsub.s32 1, %v662
    %v664 = vrot.slane %v649, %v663
    %666 = vbcast.lane.b32.xlu0 %v664, 256
    %v667 = vpop.permute.xlu0 %666
    %s669 = sor.u32 256, 8
    %670 = vbcast.lane.b32.xlu0 %v664, %s669
    %v671 = vpop.permute.xlu0 %670
    %v672 = vlaneseq
    %v673 = vshrl.u32 %v672, 7
    %v674 = vsub.s32 2, %v673
    %v675 = vrot.slane %v649, %v674
    %677 = vbcast.lane.b32.xlu0 %v675, 256
    %v678 = vpop.permute.xlu0 %677
    %s680 = sor.u32 256, 8
    %681 = vbcast.lane.b32.xlu0 %v675, %s680
    %v682 = vpop.permute.xlu0 %681
    %v683 = vlaneseq
    %v684 = vshrl.u32 %v683, 7
    %v685 = vsub.s32 3, %v684
    %v686 = vrot.slane %v649, %v685
    %688 = vbcast.lane.b32.xlu0 %v686, 256
    %v689 = vpop.permute.xlu0 %688
    %s691 = sor.u32 256, 8
    %692 = vbcast.lane.b32.xlu0 %v686, %s691
    %v693 = vpop.permute.xlu0 %692
    %v694 = vlaneseq
    %v695 = vshrl.u32 %v694, 7
    %v696 = vsub.s32 4, %v695
    %v697 = vrot.slane %v649, %v696
    %699 = vbcast.lane.b32.xlu0 %v697, 256
    %v700 = vpop.permute.xlu0 %699
    %s702 = sor.u32 256, 8
    %703 = vbcast.lane.b32.xlu0 %v697, %s702
    %v704 = vpop.permute.xlu0 %703
    %v705 = vlaneseq
    %v706 = vshrl.u32 %v705, 7
    %v707 = vsub.s32 5, %v706
    %v708 = vrot.slane %v649, %v707
    %710 = vbcast.lane.b32.xlu0 %v708, 256
    %v711 = vpop.permute.xlu0 %710
    %s713 = sor.u32 256, 8
    %714 = vbcast.lane.b32.xlu0 %v708, %s713
    %v715 = vpop.permute.xlu0 %714
    %v716 = vlaneseq
    %v717 = vshrl.u32 %v716, 7
    %v718 = vsub.s32 6, %v717
    %v719 = vrot.slane %v649, %v718
    %721 = vbcast.lane.b32.xlu0 %v719, 256
    %v722 = vpop.permute.xlu0 %721
    %s724 = sor.u32 256, 8
    %725 = vbcast.lane.b32.xlu0 %v719, %s724
    %v726 = vpop.permute.xlu0 %725
    %v727 = vlaneseq
    %v728 = vshrl.u32 %v727, 7
    %v729 = vsub.s32 7, %v728
    %v730 = vrot.slane %v649, %v729
    %732 = vbcast.lane.b32.xlu0 %v730, 256
    %v733 = vpop.permute.xlu0 %732
    %s735 = sor.u32 256, 8
    %736 = vbcast.lane.b32.xlu0 %v730, %s735
    %v737 = vpop.permute.xlu0 %736
    %v738 = vmul.f32 %v656, %v424
    %v739 = vmul.f32 %v660, %v425
    %v740 = vmul.f32 %v667, %v426
    %v741 = vmul.f32 %v671, %v427
    %v742 = vmul.f32 %v678, %v428
    %v743 = vmul.f32 %v682, %v429
    %v744 = vmul.f32 %v689, %v430
    %v745 = vmul.f32 %v693, %v431
    %v746 = vmul.f32 %v700, %v432
    %v747 = vmul.f32 %v704, %v433
    %v748 = vmul.f32 %v711, %v434
    %v749 = vmul.f32 %v715, %v435
    %v750 = vmul.f32 %v722, %v436
    %v751 = vmul.f32 %v726, %v437
    %v752 = vmul.f32 %v733, %v438
    %v753 = vmul.f32 %v737, %v439
    %v754 = vsel %vm476, %v738, 0.0
    %v755 = vsel %vm476, %v739, 0.0
    %v756 = vadd.f32 %v754, %v755
    %v757 = vrot.slane %v756, 4
    %v758 = vadd.f32 %v756, %v757
    %v759 = vrot.slane %v758, 2
    %v760 = vadd.f32 %v758, %v759
    %v761 = vrot.slane %v760, 1
    %v762 = vadd.f32 %v760, %v761
    %v763 = vsel %vm476, %v740, 0.0
    %v764 = vsel %vm476, %v741, 0.0
    %v765 = vadd.f32 %v763, %v764
    %v766 = vrot.slane %v765, 4
    %v767 = vadd.f32 %v765, %v766
    %v768 = vrot.slane %v767, 2
    %v769 = vadd.f32 %v767, %v768
    %v770 = vrot.slane %v769, 1
    %v771 = vadd.f32 %v769, %v770
    %v772 = vsel %vm476, %v742, 0.0
    %v773 = vsel %vm476, %v743, 0.0
    %v774 = vadd.f32 %v772, %v773
    %v775 = vrot.slane %v774, 4
    %v776 = vadd.f32 %v774, %v775
    %v777 = vrot.slane %v776, 2
    %v778 = vadd.f32 %v776, %v777
    %v779 = vrot.slane %v778, 1
    %v780 = vadd.f32 %v778, %v779
    %v781 = vsel %vm476, %v744, 0.0
    %v782 = vsel %vm476, %v745, 0.0
    %v783 = vadd.f32 %v781, %v782
    %v784 = vrot.slane %v783, 4
    %v785 = vadd.f32 %v783, %v784
    %v786 = vrot.slane %v785, 2
    %v787 = vadd.f32 %v785, %v786
    %v788 = vrot.slane %v787, 1
    %v789 = vadd.f32 %v787, %v788
    %v790 = vsel %vm476, %v746, 0.0
    %v791 = vsel %vm476, %v747, 0.0
    %v792 = vadd.f32 %v790, %v791
    %v793 = vrot.slane %v792, 4
    %v794 = vadd.f32 %v792, %v793
    %v795 = vrot.slane %v794, 2
    %v796 = vadd.f32 %v794, %v795
    %v797 = vrot.slane %v796, 1
    %v798 = vadd.f32 %v796, %v797
    %v799 = vsel %vm476, %v748, 0.0
    %v800 = vsel %vm476, %v749, 0.0
    %v801 = vadd.f32 %v799, %v800
    %v802 = vrot.slane %v801, 4
    %v803 = vadd.f32 %v801, %v802
    %v804 = vrot.slane %v803, 2
    %v805 = vadd.f32 %v803, %v804
    %v806 = vrot.slane %v805, 1
    %v807 = vadd.f32 %v805, %v806
    %v808 = vsel %vm476, %v750, 0.0
    %v809 = vsel %vm476, %v751, 0.0
    %v810 = vadd.f32 %v808, %v809
    %v811 = vrot.slane %v810, 4
    %v812 = vadd.f32 %v810, %v811
    %v813 = vrot.slane %v812, 2
    %v814 = vadd.f32 %v812, %v813
    %v815 = vrot.slane %v814, 1
    %v816 = vadd.f32 %v814, %v815
    %v817 = vsel %vm476, %v752, 0.0
    %v818 = vsel %vm476, %v753, 0.0
    %v819 = vadd.f32 %v817, %v818
    %v820 = vrot.slane %v819, 4
    %v821 = vadd.f32 %v819, %v820
    %v822 = vrot.slane %v821, 2
    %v823 = vadd.f32 %v821, %v822
    %v824 = vrot.slane %v823, 1
    %v825 = vadd.f32 %v823, %v824
    %s826 = smul.u32 1, 1
    %s827 = sshll.u32 %s826, 4
    %828 = dma.done [#allocation3], %s827
    %s829 = sshll.u32 %s826, 4
    %830 = dma.done %s97, %s829
    %s831 = sshll.u32 %s826, 4
    %832 = dma.done %s144, %s831
    %s833 = sshll.u32 %s826, 4
    %834 = dma.done %s191, %s833
    %s835 = sshll.u32 %s826, 4
    %836 = dma.done %s238, %s835
    %s837 = sshll.u32 %s826, 4
    %838 = dma.done %s285, %s837
    %s839 = sshll.u32 %s826, 4
    %840 = dma.done %s332, %s839
    %s841 = sshll.u32 %s826, 4
    %842 = dma.done %s379, %s841
    %v843 = vld [vmem:[#allocation2] sm:$0xff]
    %v852 = vsel %vm617, %v771, %v762
    %v853 = vsel %vm619, %v780, %v852
    %v854 = vsel %vm621, %v789, %v853
    %v855 = vsel %vm623, %v798, %v854
    %v856 = vsel %vm625, %v807, %v855
    %v857 = vsel %vm627, %v816, %v856
    %v858 = vsel %vm629, %v825, %v857
    %861 = vrot.lane.b32.xlu0 %v843, 64
    %v862 = vpop.permute.xlu0 %861
    %865 = vrot.lane.b32.xlu0 %v440, 96
    %v866 = vpop.permute.xlu0 %865
    %v868 = vsel %vm476, %v858, %v862
    %vm869 = vcmask 785408
    %v870 = vsel %vm869, %v868, %v866
    %v871 = vld [vmem:[%s4] sm:$0xff]
    %v872 = vld [vmem:[%s4 + $0x10] sm:$0xff]
    %v873 = vld [vmem:[%s4 + $0x20] sm:$0xff]
    %v874 = vld [vmem:[%s4 + $0x30] sm:$0xff]
    %v875 = vld [vmem:[%s4 + $0x40] sm:$0xff]
    %v876 = vld [vmem:[%s4 + $0x50] sm:$0xff]
    %v877 = vld [vmem:[%s4 + $0x60] sm:$0xff]
    %v878 = vld [vmem:[%s4 + $0x70] sm:$0xff]
    %v879 = vld [vmem:[%s4 + $0x80] sm:$0xff]
    %v880 = vld [vmem:[%s4 + $0x90] sm:$0xff]
    %v881 = vld [vmem:[%s4 + $0xa0] sm:$0xff]
    %v882 = vld [vmem:[%s4 + $0xb0] sm:$0xff]
    %v883 = vld [vmem:[%s4 + $0xc0] sm:$0xff]
    %v884 = vld [vmem:[%s4 + $0xd0] sm:$0xff]
    %v885 = vld [vmem:[%s4 + $0xe0] sm:$0xff]
    %v886 = vld [vmem:[%s4 + $0xf0] sm:$0xff]
    %v887 = vlaneseq
    %v888 = vshrl.u32 %v887, 7
    %v889 = vsub.s32 0, %v888
    %v890 = vrot.slane %v444, %v889
    %891 = vmatprep.subr.mxu0 0.0
    %892 = vmatpush1.msra.mxu0 %v871
    %893 = vmatprep.subr.mxu0 0.0
    %894 = vmatpush1.msra.mxu0 %v872
    %895 = vmatprep.subr.mxu0 0.0
    %896 = vmatpush1.msra.mxu0 %v873
    %897 = vmatprep.subr.mxu0 0.0
    %898 = vmatpush1.msra.mxu0 %v874
    %899 = vmatprep.subr.mxu0 0.0
    %900 = vmatpush1.msra.mxu0 %v875
    %901 = vmatprep.subr.mxu0 0.0
    %902 = vmatpush1.msra.mxu0 %v876
    %903 = vmatprep.subr.mxu0 0.0
    %904 = vmatpush1.msra.mxu0 %v877
    %905 = vmatprep.subr.mxu0 0.0
    %906 = vmatpush1.msra.mxu0 %v878
    %907 = vmatprep.subr.mxu0 0.0
    %908 = vmatpush1.msra.mxu0 %v879
    %909 = vmatprep.subr.mxu0 0.0
    %910 = vmatpush1.msra.mxu0 %v880
    %911 = vmatprep.subr.mxu0 0.0
    %912 = vmatpush1.msra.mxu0 %v881
    %913 = vmatprep.subr.mxu0 0.0
    %914 = vmatpush1.msra.mxu0 %v882
    %915 = vmatprep.subr.mxu0 0.0
    %916 = vmatpush1.msra.mxu0 %v883
    %917 = vmatprep.subr.mxu0 0.0
    %918 = vmatpush1.msra.mxu0 %v884
    %919 = vmatprep.subr.mxu0 0.0
    %920 = vmatpush1.msra.mxu0 %v885
    %921 = vmatprep.subr.mxu0 0.0
    %922 = vmatpush1.msra.mxu0 %v886
    %923 = vmatprep.subr.mxu0 0.0
    %924 = vmatpush1.msra.mxu0 0.0
    %925 = vmatprep.subr.mxu0 0.0
    %926 = vmatpush1.msra.mxu0 0.0
    %927 = vmatprep.subr.mxu0 0.0
    %928 = vmatpush1.msra.mxu0 0.0
    %929 = vmatprep.subr.mxu0 0.0
    %930 = vmatpush1.msra.mxu0 0.0
    %931 = vmatprep.subr.mxu0 0.0
    %932 = vmatpush1.msra.mxu0 0.0
    %933 = vmatprep.subr.mxu0 0.0
    %934 = vmatpush1.msra.mxu0 0.0
    %935 = vmatprep.subr.mxu0 0.0
    %936 = vmatpush1.msra.mxu0 0.0
    %937 = vmatprep.subr.mxu0 0.0
    %938 = vmatpush1.msra.mxu0 0.0
    %939 = vmatprep.subr.mxu0 0.0
    %940 = vmatpush1.msra.mxu0 0.0
    %941 = vmatprep.subr.mxu0 0.0
    %942 = vmatpush1.msra.mxu0 0.0
    %943 = vmatprep.subr.mxu0 0.0
    %944 = vmatpush1.msra.mxu0 0.0
    %945 = vmatprep.subr.mxu0 0.0
    %946 = vmatpush1.msra.mxu0 0.0
    %947 = vmatprep.subr.mxu0 0.0
    %948 = vmatpush1.msra.mxu0 0.0
    %949 = vmatprep.subr.mxu0 0.0
    %950 = vmatpush1.msra.mxu0 0.0
    %951 = vmatprep.subr.mxu0 0.0
    %952 = vmatpush1.msra.mxu0 0.0
    %953 = vmatprep.subr.mxu0 0.0
    %954 = vmatpush1.msra.mxu0 0.0
    %955 = vmatprep.mubr.f32.mxu0 0.0
    %956 = vmatmul.mubr.f32.gmra.mrb[0].mxu0 %v870
    %v957 = vpop.f32.mrb[0].mxu0
    %v958 = vadd.f32 %v890, %v957
    %v959 = vpop.f32.mrb[0].mxu0
    %960 = vdwg.mxu0
    %v961 = vxor.u32 %v958, 2147483648
    %v962 = vmul.f32 %v961, 1.442695
    %v963 = vpow.pop %v962
    %v964 = vadd.f32 %v963, 1.0
    %v965 = vrcp.pop %v964
    %v966 = vmul.f32 1.0, %v965
    %v967 = vtanh.pop %v958
    %969 = vrot.lane.b32.xlu0 %v441, 32
    %v970 = vpop.permute.xlu0 %969
    %v972 = vmul.f32 %v966, %v970
    %974 = vrot.lane.b32.xlu0 %v967, 64
    %v975 = vpop.permute.xlu0 %974
    %v977 = vmul.f32 %v966, %v975
    %979 = vrot.lane.b32.xlu0 %v977, 32
    %v980 = vpop.permute.xlu0 %979
    %v982 = vadd.f32 %v972, %v980
    %v983 = vtanh.pop %v982
    %985 = vrot.lane.b32.xlu0 %v983, 64
    %v986 = vpop.permute.xlu0 %985
    %v988 = vmul.f32 %v966, %v986
    %v989 = vld [vmem:[%s4 + $0x8] sm:$0xff]
    %v990 = vld [vmem:[%s4 + $0x18] sm:$0xff]
    %v991 = vld [vmem:[%s4 + $0x28] sm:$0xff]
    %v992 = vld [vmem:[%s4 + $0x38] sm:$0xff]
    %v993 = vlaneseq
    %v994 = vshrl.u32 %v993, 7
    %v995 = vsub.s32 0, %v994
    %v996 = vrot.slane %v445, %v995
    %998 = vrot.lane.b32.xlu0 %v988, 32
    %v999 = vpop.permute.xlu0 %998
    %v1000 = vsel %vm452, %v999, 0
    %1002 = vmatprep.subr.mxu0 0.0
    %1003 = vmatpush1.msra.mxu0 %v989
    %1004 = vmatprep.subr.mxu0 0.0
    %1005 = vmatpush1.msra.mxu0 %v990
    %1006 = vmatprep.subr.mxu0 0.0
    %1007 = vmatpush1.msra.mxu0 %v991
    %1008 = vmatprep.subr.mxu0 0.0
    %1009 = vmatpush1.msra.mxu0 %v992
    %1010 = vmatprep.subr.mxu0 0.0
    %1011 = vmatpush1.msra.mxu0 0.0
    %1012 = vmatprep.subr.mxu0 0.0
    %1013 = vmatpush1.msra.mxu0 0.0
    %1014 = vmatprep.subr.mxu0 0.0
    %1015 = vmatpush1.msra.mxu0 0.0
    %1016 = vmatprep.subr.mxu0 0.0
    %1017 = vmatpush1.msra.mxu0 0.0
    %1018 = vmatprep.subr.mxu0 0.0
    %1019 = vmatpush1.msra.mxu0 0.0
    %1020 = vmatprep.subr.mxu0 0.0
    %1021 = vmatpush1.msra.mxu0 0.0
    %1022 = vmatprep.subr.mxu0 0.0
    %1023 = vmatpush1.msra.mxu0 0.0
    %1024 = vmatprep.subr.mxu0 0.0
    %1025 = vmatpush1.msra.mxu0 0.0
    %1026 = vmatprep.subr.mxu0 0.0
    %1027 = vmatpush1.msra.mxu0 0.0
    %1028 = vmatprep.subr.mxu0 0.0
    %1029 = vmatpush1.msra.mxu0 0.0
    %1030 = vmatprep.subr.mxu0 0.0
    %1031 = vmatpush1.msra.mxu0 0.0
    %1032 = vmatprep.subr.mxu0 0.0
    %1033 = vmatpush1.msra.mxu0 0.0
    %1034 = vmatprep.subr.mxu0 0.0
    %1035 = vmatpush1.msra.mxu0 0.0
    %1036 = vmatprep.subr.mxu0 0.0
    %1037 = vmatpush1.msra.mxu0 0.0
    %1038 = vmatprep.subr.mxu0 0.0
    %1039 = vmatpush1.msra.mxu0 0.0
    %1040 = vmatprep.subr.mxu0 0.0
    %1041 = vmatpush1.msra.mxu0 0.0
    %1042 = vmatprep.subr.mxu0 0.0
    %1043 = vmatpush1.msra.mxu0 0.0
    %1044 = vmatprep.subr.mxu0 0.0
    %1045 = vmatpush1.msra.mxu0 0.0
    %1046 = vmatprep.subr.mxu0 0.0
    %1047 = vmatpush1.msra.mxu0 0.0
    %1048 = vmatprep.subr.mxu0 0.0
    %1049 = vmatpush1.msra.mxu0 0.0
    %1050 = vmatprep.subr.mxu0 0.0
    %1051 = vmatpush1.msra.mxu0 0.0
    %1052 = vmatprep.subr.mxu0 0.0
    %1053 = vmatpush1.msra.mxu0 0.0
    %1054 = vmatprep.subr.mxu0 0.0
    %1055 = vmatpush1.msra.mxu0 0.0
    %1056 = vmatprep.subr.mxu0 0.0
    %1057 = vmatpush1.msra.mxu0 0.0
    %1058 = vmatprep.subr.mxu0 0.0
    %1059 = vmatpush1.msra.mxu0 0.0
    %1060 = vmatprep.subr.mxu0 0.0
    %1061 = vmatpush1.msra.mxu0 0.0
    %1062 = vmatprep.subr.mxu0 0.0
    %1063 = vmatpush1.msra.mxu0 0.0
    %1064 = vmatprep.subr.mxu0 0.0
    %1065 = vmatpush1.msra.mxu0 0.0
    %1066 = vmatprep.mubr.f32.mxu0 0.0
    %1067 = vmatmul.mubr.f32.gmra.mrb[0].mxu0 %v1000
    %v1068 = vpop.f32.mrb[0].mxu0
    %v1069 = vadd.f32 %v996, %v1068
    %v1070 = vpop.f32.mrb[0].mxu0
    %1071 = vdwg.mxu0
    %1072 = vst.msk [vmem:[#allocation7] sm:$0xff] %vm476, %v1069
    %1074 = vst.msk [vmem:[#allocation8] sm:$0xff] %vm452, %v999
    %1076 = vrot.lane.b32.xlu0 %v982, 96
    %v1077 = vpop.permute.xlu0 %1076
    %1079 = vst.msk [vmem:[#allocation10] sm:$0xff] %vm452, %v1077
    // Predicated region
    $region270: #{attn_decoder_forward.1} parent=1 // pred_check
      _
    $region271: #{attn_decoder_forward.1} parent=1 // pred_check_branch
      %1081 = sbr.rel (0) target = $region273
    $region272: #{attn_decoder_forward.1} parent=1 // pred_region
      %s1083 = ssub.s32 128, 128
      %1084 = vsyncadd [#allocation5], %s1083
      %s1086 = sshll.u32 [#allocation7], 4
      %s1087 = int_to_ptr.vmem [resolvable:$true] %s1086
      %1089 = dma.vmem_to_hbm [thread:$0]  %s1087, 128, %s7, [#allocation5]
    $region273: #{attn_decoder_forward.1} parent=1 // pred_fallthru
      _
    // Predicated region
    $region274: #{attn_decoder_forward.1} parent=1 // pred_check
      _
    $region275: #{attn_decoder_forward.1} parent=1 // pred_check_branch
      %1091 = sbr.rel (0) target = $region277
    $region276: #{attn_decoder_forward.1} parent=1 // pred_region
      %s1093 = ssub.s32 128, 128
      %1094 = vsyncadd [#allocation9], %s1093
      %s1096 = sshll.u32 [#allocation8], 4
      %s1097 = int_to_ptr.vmem [resolvable:$true] %s1096
      %1099 = dma.vmem_to_hbm [thread:$0]  %s1097, 128, %s8, [#allocation9]
    $region277: #{attn_decoder_forward.1} parent=1 // pred_fallthru
      _
    // Predicated region
    $region278: #{attn_decoder_forward.1} parent=1 // pred_check
      _
    $region279: #{attn_decoder_forward.1} parent=1 // pred_check_branch
      %1101 = sbr.rel (0) target = $region281
    $region280: #{attn_decoder_forward.1} parent=1 // pred_region
      %s1103 = ssub.s32 128, 128
      %1104 = vsyncadd [#allocation9], %s1103
      %s1106 = sshll.u32 [#allocation10], 4
      %s1107 = int_to_ptr.vmem [resolvable:$true] %s1106
      %1109 = dma.vmem_to_hbm [thread:$0]  %s1107, 128, %s9, [#allocation9]
    $region281: #{attn_decoder_forward.1} parent=1 // pred_fallthru
      _
    // Predicated region
    $region282: #{attn_decoder_forward.1} parent=1 // pred_check
      _
    $region283: #{attn_decoder_forward.1} parent=1 // pred_check_branch
      %1111 = sbr.rel (0) target = $region285
    $region284: #{attn_decoder_forward.1} parent=1 // pred_region
      %1112 = dma.done [#allocation5], 128
    $region285: #{attn_decoder_forward.1} parent=1 // pred_fallthru
      _
    // Predicated region
    $region286: #{attn_decoder_forward.1} parent=1 // pred_check
      _
    $region287: #{attn_decoder_forward.1} parent=1 // pred_check_branch
      %1114 = sbr.rel (0) target = $region289
    $region288: #{attn_decoder_forward.1} parent=1 // pred_region
      %1115 = dma.done [#allocation9], 128
    $region289: #{attn_decoder_forward.1} parent=1 // pred_fallthru
      _
    // Predicated region
    $region290: #{attn_decoder_forward.1} parent=1 // pred_check
      _
    $region291: #{attn_decoder_forward.1} parent=1 // pred_check_branch
      %1117 = sbr.rel (0) target = $region293
    $region292: #{attn_decoder_forward.1} parent=1 // pred_region
      %1118 = dma.done [#allocation9], 128
    $region293: #{attn_decoder_forward.1} parent=1 // pred_fallthru
      _
    %1119 = vsyncpa [#allocation5], 1
    %1120 = vsyncpa [#allocation9], 1
    %1121 = vsyncpa [#allocation6], 1
  %1122 = vsyncmov [#allocation3]
  %s1123 = vpop.sfrf %1122
  %p1124 = scmp.eq.s32.totalorder %s1123, 0
  %p1125 = pneg %p1124
  %1127 = shalt.err (%p1125)
  %s1128 = scalar_lea.sflag [#allocation3], 1
  %1129 = vsyncmov %s1128
  %s1130 = vpop.sfrf %1129
  %p1131 = scmp.eq.s32.totalorder %s1130, 0
  %p1132 = pneg %p1131
  %1134 = shalt.err (%p1132)
  %s1135 = scalar_lea.sflag [#allocation3], 2
  %1136 = vsyncmov %s1135
  %s1137 = vpop.sfrf %1136
  %p1138 = scmp.eq.s32.totalorder %s1137, 0
  %p1139 = pneg %p1138
  %1141 = shalt.err (%p1139)
  %s1142 = scalar_lea.sflag [#allocation3], 3
  %1143 = vsyncmov %s1142
  %s1144 = vpop.sfrf %1143
  %p1145 = scmp.eq.s32.totalorder %s1144, 0
  %p1146 = pneg %p1145
  %1148 = shalt.err (%p1146)
  %s1149 = scalar_lea.sflag [#allocation3], 4
  %1150 = vsyncmov %s1149
  %s1151 = vpop.sfrf %1150
  %p1152 = scmp.eq.s32.totalorder %s1151, 0
  %p1153 = pneg %p1152
  %1155 = shalt.err (%p1153)
  %s1156 = scalar_lea.sflag [#allocation3], 5
  %1157 = vsyncmov %s1156
  %s1158 = vpop.sfrf %1157
  %p1159 = scmp.eq.s32.totalorder %s1158, 0
  %p1160 = pneg %p1159
  %1162 = shalt.err (%p1160)
  %s1163 = scalar_lea.sflag [#allocation3], 6
  %1164 = vsyncmov %s1163
  %s1165 = vpop.sfrf %1164
  %p1166 = scmp.eq.s32.totalorder %s1165, 0
  %p1167 = pneg %p1166
  %1169 = shalt.err (%p1167)
  %s1170 = scalar_lea.sflag [#allocation3], 7
  %1171 = vsyncmov %s1170
  %s1172 = vpop.sfrf %1171
  %p1173 = scmp.eq.s32.totalorder %s1172, 0
  %p1174 = pneg %p1173
  %1176 = shalt.err (%p1174)

</llo_original>
